<compile_context>
chip_gen: v7x
topology: tpu7x:2x2x1
jax: 0.10.0
libtpu: 0.0.40
codegen_flags: <defaults>
</compile_context>

<pallas_src>
import functools
import math

import jax
import jax.numpy as jnp
from jax.experimental import pallas as pl
from jax.experimental.pallas import tpu as pltpu


def _mha_kernel(q_ref, k_ref, v_ref, wq_ref, wk_ref, wv_ref, wo_ref,
                out_ref, *attn_refs, n_head, d_h, inv_scale):
    """One grid step == one batch element.

    q_ref/k_ref/v_ref : (1, S, D)            f32 VMEM
    wq/wk/wv_ref      : (n_head, D, d_h)     bf16, grid-invariant (resident)
    wo_ref            : (n_head, d_h, D)     bf16, output projection split per head
    out_ref           : (1, S, D)            f32
    attn_refs         : optional ((1, n_head, S, S),) f32
    """
    S = q_ref.shape[1]
    D = q_ref.shape[2]

    # bf16 MXU operands; all accumulation in f32 via preferred_element_type.
    x_q = jnp.broadcast_to(q_ref[0].astype(jnp.bfloat16)[None], (n_head, S, D))
    x_k = jnp.broadcast_to(k_ref[0].astype(jnp.bfloat16)[None], (n_head, S, D))
    x_v = jnp.broadcast_to(v_ref[0].astype(jnp.bfloat16)[None], (n_head, S, D))

    # Per-head projections as leading-batch batched matmuls: no lane slicing and no
    # (S, H*d_h) -> (H, S, d_h) lane-splitting reshape afterwards.
    q_h = jnp.einsum("hsd,hde->hse", x_q, wq_ref[...],
                     preferred_element_type=jnp.float32)          # (H, S, d_h) f32
    k_h = jnp.einsum("hsd,hde->hse", x_k, wk_ref[...],
                     preferred_element_type=jnp.float32)
    v_h = jnp.einsum("hsd,hde->hse", x_v, wv_ref[...],
                     preferred_element_type=jnp.float32)

    # 1/sqrt(d_h) applied in f32 (kept out of the bf16 weights -> no double rounding).
    q_h = (q_h * inv_scale).astype(jnp.bfloat16)
    k_h = k_h.astype(jnp.bfloat16)
    v_h = v_h.astype(jnp.bfloat16)

    # Scores + numerically stable softmax for all heads at once (softmax math in f32).
    scores = jnp.einsum("hqd,hkd->hqk", q_h, k_h,
                        preferred_element_type=jnp.float32)        # (H, S, S)
    m = jnp.max(scores, axis=-1, keepdims=True)
    e = jnp.exp(scores - m)
    s = jnp.sum(e, axis=-1, keepdims=True)
    attn = e * (1.0 / s)          # exact divide: attn probs are a user-visible output

    if attn_refs:                 # attention-probability output is optional
        attn_refs[0][0] = attn    # single store of the whole (H, S, S) block

    # attn @ V for all heads; the context stays in vregs (no VMEM concat slab).
    ctx = jnp.einsum("hqk,hkd->hqd", attn.astype(jnp.bfloat16), v_h,
                     preferred_element_type=jnp.float32)           # (H, S, d_h)

    # Output projection: concat_h(ctx_h) @ Wo == sum_h ctx_h @ Wo[h*d_h:(h+1)*d_h, :].
    # With Wo pre-split to (H, d_h, D) this is one batched matmul + a head-axis sum.
    out_h = jnp.einsum("hqd,hde->hqe", ctx.astype(jnp.bfloat16), wo_ref[...],
                       preferred_element_type=jnp.float32)         # (H, S, D)
    out_ref[0] = jnp.sum(out_h, axis=0).astype(out_ref.dtype)      # (S, D)


def prepare_mha_weights(wq, wk, wv, wo):
    """One-time parameter preparation (hoisted out of the per-call path).

    wq/wk/wv : (n_head, hidden_dim, d_h)  per-head Linear weights, pre-transposed for x @ W
    wo       : (hidden_dim, hidden_dim)   output Linear weight, pre-transposed for x @ W
    Returns bf16 MXU-ready weights; Wo is split per head so the kernel can fold the
    head concat into a batched matmul + head sum.
    """
    n_head, hidden_dim, d_h = wq.shape
    return (wq.astype(jnp.bfloat16),
            wk.astype(jnp.bfloat16),
            wv.astype(jnp.bfloat16),
            wo.reshape(n_head, d_h, hidden_dim).astype(jnp.bfloat16))


def multi_head_attention(query, key, value, weights, *, return_attention=True):
    """query/key/value: (B, S, D) f32.  weights: output of prepare_mha_weights().

    Returns (output, attn) with attn of shape (B, n_head, S, S); the PyTorch module's
    per-head list is `list(jnp.moveaxis(attn, 1, 0))` -- kept stacked here to avoid
    post-kernel slice/copy ops.
    """
    wq_b, wk_b, wv_b, wo_b = weights
    B, S, D = query.shape
    n_head, _, d_h = wq_b.shape

    kernel = functools.partial(_mha_kernel, n_head=n_head, d_h=d_h,
                               inv_scale=1.0 / math.sqrt(d_h))

    act_spec = pl.BlockSpec((1, S, D), lambda b: (b, 0, 0))
    w_spec = pl.BlockSpec((n_head, D, d_h), lambda b: (0, 0, 0))    # grid-invariant
    wo_spec = pl.BlockSpec((n_head, d_h, D), lambda b: (0, 0, 0))   # grid-invariant

    out_shape = [jax.ShapeDtypeStruct((B, S, D), jnp.float32)]
    out_specs = [pl.BlockSpec((1, S, D), lambda b: (b, 0, 0))]
    if return_attention:
        out_shape.append(jax.ShapeDtypeStruct((B, n_head, S, S), jnp.float32))
        out_specs.append(pl.BlockSpec((1, n_head, S, S), lambda b: (b, 0, 0, 0)))

    results = pl.pallas_call(
        kernel,
        out_shape=tuple(out_shape),
        grid_spec=pltpu.PrefetchScalarGridSpec(
            num_scalar_prefetch=0,
            grid=(B,),
            in_specs=[act_spec, act_spec, act_spec, w_spec, w_spec, w_spec, wo_spec],
            out_specs=tuple(out_specs),
        ),
        compiler_params=pltpu.CompilerParams(
            dimension_semantics=("parallel",),
            vmem_limit_bytes=32 * 1024 * 1024,   # explicit (v5e default is only 16 MiB)
        ),
    )(query, key, value, wq_b, wk_b, wv_b, wo_b)

    if return_attention:
        out, attn = results
        return out, attn
    return results[0]


def _reference(query, key, value, wq, wk, wv, wo):
    """Pure-JAX f32 reference matching the PyTorch forward (eval mode, mask=None)."""
    n_head, _, d_h = wq.shape
    scale = math.sqrt(d_h)
    head_outs, attns = [], []
    for h in range(n_head):
        q = query @ wq[h]
        k = key @ wk[h]
        v = value @ wv[h]
        scores = jnp.einsum("bqd,bkd->bqk", q, k) / scale
        a = jax.nn.softmax(scores, axis=-1)
        attns.append(a)
        head_outs.append(jnp.einsum("bqk,bkd->bqd", a, v))
    concat = jnp.concatenate(head_outs, axis=-1)
    return concat @ wo, jnp.stack(attns, axis=1)


if __name__ == "__main__":
    # Small shapes implied by the module: hidden_dim=32, n_head=4, seq=8, batch=2.
    B, S, D, N_HEAD = 2, 8, 32, 4
    D_H = D // N_HEAD

    key0 = jax.random.PRNGKey(0)
    ks = jax.random.split(key0, 7)
    query = jax.random.normal(ks[0], (B, S, D), dtype=jnp.float32)
    keyx = jax.random.normal(ks[1], (B, S, D), dtype=jnp.float32)
    value = jax.random.normal(ks[2], (B, S, D), dtype=jnp.float32)

    # Deterministic "init_weight"-style params (uniform), pre-transposed for x @ W.
    wq = jax.random.uniform(ks[3], (N_HEAD, D, D_H), jnp.float32, -0.1, 0.1)
    wk = jax.random.uniform(ks[4], (N_HEAD, D, D_H), jnp.float32, -0.1, 0.1)
    wv = jax.random.uniform(ks[5], (N_HEAD, D, D_H), jnp.float32, -0.1, 0.1)
    wo = jax.random.uniform(ks[6], (D, D), jnp.float32, -0.1, 0.1)

    weights = prepare_mha_weights(wq, wk, wv, wo)   # one-time prep, not per call

    out, attn = multi_head_attention(query, keyx, value, weights)
    out = jax.block_until_ready(out)
    attn = jax.block_until_ready(attn)

    ref_out, ref_attn = _reference(query, keyx, value, wq, wk, wv, wo)
    # bf16 MXU operands (f32 accumulation) vs. the pure-f32 reference -> modest tolerance.
    assert jnp.allclose(out, ref_out, atol=2e-2, rtol=2e-2), \
        float(jnp.max(jnp.abs(out - ref_out)))
    assert jnp.allclose(attn, ref_attn, atol=1e-2, rtol=1e-2), \
        float(jnp.max(jnp.abs(attn - ref_attn)))

    print("KERNEL_OK")
</pallas_src>

<mosaic_0001>
module attributes {stable_mosaic.version = 11 : i64} {
  func.func @_mha_kernel(%arg0: i32, %arg1: memref<1x8x32xf32, #tpu.memory_space<vmem>>, %arg2: memref<1x8x32xf32, #tpu.memory_space<vmem>>, %arg3: memref<1x8x32xf32, #tpu.memory_space<vmem>>, %arg4: memref<4x32x8xbf16, #tpu.memory_space<vmem>>, %arg5: memref<4x32x8xbf16, #tpu.memory_space<vmem>>, %arg6: memref<4x32x8xbf16, #tpu.memory_space<vmem>>, %arg7: memref<4x8x32xbf16, #tpu.memory_space<vmem>>, %arg8: memref<1x8x32xf32, #tpu.memory_space<vmem>>, %arg9: memref<1x4x8x8xf32, #tpu.memory_space<vmem>>) attributes {dimension_semantics = [#tpu.dimension_semantics<parallel>], iteration_bounds = array<i64: 2>, scalar_prefetch = 0 : i64, scratch_operands = 0 : i64, tpu.core_type = #tpu.core_type<tc>, window_params = [{transform_indices = @transform_0, window_bounds = array<i64: 1, 8, 32>}, {transform_indices = @transform_1, window_bounds = array<i64: 1, 8, 32>}, {transform_indices = @transform_2, window_bounds = array<i64: 1, 8, 32>}, {pipeline_mode = #tpu.pipeline_mode<synchronous>, transform_indices = @transform_3, window_bounds = array<i64: 4, 32, 8>}, {pipeline_mode = #tpu.pipeline_mode<synchronous>, transform_indices = @transform_4, window_bounds = array<i64: 4, 32, 8>}, {pipeline_mode = #tpu.pipeline_mode<synchronous>, transform_indices = @transform_5, window_bounds = array<i64: 4, 32, 8>}, {pipeline_mode = #tpu.pipeline_mode<synchronous>, transform_indices = @transform_6, window_bounds = array<i64: 4, 8, 32>}, {transform_indices = @transform_7, window_bounds = array<i64: 1, 8, 32>}, {transform_indices = @transform_8, window_bounds = array<i64: 1, 4, 8, 8>}]} {
    %c0 = arith.constant 0 : index
    %c0_0 = arith.constant 0 : index
    %c0_1 = arith.constant 0 : index
    %0 = vector.load %arg1[%c0, %c0_0, %c0_1] : memref<1x8x32xf32, #tpu.memory_space<vmem>>, vector<1x8x32xf32>
    %1 = vector.shape_cast %0 : vector<1x8x32xf32> to vector<8x32xf32>
    %2 = arith.truncf %1 : vector<8x32xf32> to vector<8x32xbf16>
    %3 = vector.shape_cast %2 : vector<8x32xbf16> to vector<1x8x32xbf16>
    %4 = vector.shape_cast %3 : vector<1x8x32xbf16> to vector<1x8x32xbf16>
    %5 = vector.broadcast %4 : vector<1x8x32xbf16> to vector<4x8x32xbf16>
    %c0_2 = arith.constant 0 : index
    %c0_3 = arith.constant 0 : index
    %c0_4 = arith.constant 0 : index
    %6 = vector.load %arg2[%c0_2, %c0_3, %c0_4] : memref<1x8x32xf32, #tpu.memory_space<vmem>>, vector<1x8x32xf32>
    %7 = vector.shape_cast %6 : vector<1x8x32xf32> to vector<8x32xf32>
    %8 = arith.truncf %7 : vector<8x32xf32> to vector<8x32xbf16>
    %9 = vector.shape_cast %8 : vector<8x32xbf16> to vector<1x8x32xbf16>
    %10 = vector.shape_cast %9 : vector<1x8x32xbf16> to vector<1x8x32xbf16>
    %11 = vector.broadcast %10 : vector<1x8x32xbf16> to vector<4x8x32xbf16>
    %c0_5 = arith.constant 0 : index
    %c0_6 = arith.constant 0 : index
    %c0_7 = arith.constant 0 : index
    %12 = vector.load %arg3[%c0_5, %c0_6, %c0_7] : memref<1x8x32xf32, #tpu.memory_space<vmem>>, vector<1x8x32xf32>
    %13 = vector.shape_cast %12 : vector<1x8x32xf32> to vector<8x32xf32>
    %14 = arith.truncf %13 : vector<8x32xf32> to vector<8x32xbf16>
    %15 = vector.shape_cast %14 : vector<8x32xbf16> to vector<1x8x32xbf16>
    %16 = vector.shape_cast %15 : vector<1x8x32xbf16> to vector<1x8x32xbf16>
    %17 = vector.broadcast %16 : vector<1x8x32xbf16> to vector<4x8x32xbf16>
    %c0_8 = arith.constant 0 : index
    %c0_9 = arith.constant 0 : index
    %c0_10 = arith.constant 0 : index
    %18 = vector.load %arg4[%c0_8, %c0_9, %c0_10] : memref<4x32x8xbf16, #tpu.memory_space<vmem>>, vector<4x32x8xbf16>
    "tpu.trace_start"() <{level = 10 : i32, message = "hsd,hde->hse"}> : () -> ()
    %cst = arith.constant dense<0.000000e+00> : vector<4x8x8xf32>
    %19 = tpu.matmul %5, %18, %cst {dimension_numbers = #tpu.dot_dimension_numbers<[2], [1], [1], [2], [0, 0, 0, 1, 1, 2], [0], [0]>} : vector<4x8x32xbf16>, vector<4x32x8xbf16>, vector<4x8x8xf32> -> vector<4x8x8xf32>
    "tpu.trace_stop"() : () -> ()
    %c0_11 = arith.constant 0 : index
    %c0_12 = arith.constant 0 : index
    %c0_13 = arith.constant 0 : index
    %20 = vector.load %arg5[%c0_11, %c0_12, %c0_13] : memref<4x32x8xbf16, #tpu.memory_space<vmem>>, vector<4x32x8xbf16>
    "tpu.trace_start"() <{level = 10 : i32, message = "hsd,hde->hse"}> : () -> ()
    %cst_14 = arith.constant dense<0.000000e+00> : vector<4x8x8xf32>
    %21 = tpu.matmul %11, %20, %cst_14 {dimension_numbers = #tpu.dot_dimension_numbers<[2], [1], [1], [2], [0, 0, 0, 1, 1, 2], [0], [0]>} : vector<4x8x32xbf16>, vector<4x32x8xbf16>, vector<4x8x8xf32> -> vector<4x8x8xf32>
    "tpu.trace_stop"() : () -> ()
    %c0_15 = arith.constant 0 : index
    %c0_16 = arith.constant 0 : index
    %c0_17 = arith.constant 0 : index
    %22 = vector.load %arg6[%c0_15, %c0_16, %c0_17] : memref<4x32x8xbf16, #tpu.memory_space<vmem>>, vector<4x32x8xbf16>
    "tpu.trace_start"() <{level = 10 : i32, message = "hsd,hde->hse"}> : () -> ()
    %cst_18 = arith.constant dense<0.000000e+00> : vector<4x8x8xf32>
    %23 = tpu.matmul %17, %22, %cst_18 {dimension_numbers = #tpu.dot_dimension_numbers<[2], [1], [1], [2], [0, 0, 0, 1, 1, 2], [0], [0]>} : vector<4x8x32xbf16>, vector<4x32x8xbf16>, vector<4x8x8xf32> -> vector<4x8x8xf32>
    "tpu.trace_stop"() : () -> ()
    %cst_19 = arith.constant 0.353553385 : f32
    %24 = vector.broadcast %cst_19 : f32 to vector<4x8x8xf32>
    %25 = arith.mulf %19, %24 : vector<4x8x8xf32>
    %26 = arith.truncf %25 : vector<4x8x8xf32> to vector<4x8x8xbf16>
    %27 = arith.truncf %21 : vector<4x8x8xf32> to vector<4x8x8xbf16>
    %28 = arith.truncf %23 : vector<4x8x8xf32> to vector<4x8x8xbf16>
    "tpu.trace_start"() <{level = 10 : i32, message = "hqd,hkd->hqk"}> : () -> ()
    %cst_20 = arith.constant dense<0.000000e+00> : vector<4x8x8xf32>
    %29 = tpu.matmul %26, %27, %cst_20 {dimension_numbers = #tpu.dot_dimension_numbers<[2], [2], [1], [1], [0, 0, 0, 1, 1, 1], [0], [0]>} : vector<4x8x8xbf16>, vector<4x8x8xbf16>, vector<4x8x8xf32> -> vector<4x8x8xf32>
    "tpu.trace_stop"() : () -> ()
    %cst_21 = arith.constant dense<0xFF800000> : vector<4x8xf32>
    %30 = vector.multi_reduction <maximumf>, %29, %cst_21 [2] : vector<4x8x8xf32> to vector<4x8xf32>
    %31 = vector.shape_cast %30 : vector<4x8xf32> to vector<4x8x1xf32>
    %32 = vector.broadcast %31 : vector<4x8x1xf32> to vector<4x8x8xf32>
    %33 = arith.subf %29, %32 : vector<4x8x8xf32>
    %34 = math.exp %33 : vector<4x8x8xf32>
    %cst_22 = arith.constant dense<0.000000e+00> : vector<4x8xf32>
    %35 = vector.multi_reduction <add>, %34, %cst_22 [2] : vector<4x8x8xf32> to vector<4x8xf32>
    %36 = vector.shape_cast %35 : vector<4x8xf32> to vector<4x8x1xf32>
    %cst_23 = arith.constant 1.000000e+00 : f32
    %37 = vector.broadcast %cst_23 : f32 to vector<4x8x1xf32>
    %38 = arith.divf %37, %36 : vector<4x8x1xf32>
    %39 = vector.broadcast %38 : vector<4x8x1xf32> to vector<4x8x8xf32>
    %40 = arith.mulf %34, %39 : vector<4x8x8xf32>
    %c0_24 = arith.constant 0 : index
    %c0_25 = arith.constant 0 : index
    %c0_26 = arith.constant 0 : index
    %c0_27 = arith.constant 0 : index
    %41 = vector.load %arg9[%c0_24, %c0_25, %c0_26, %c0_27] : memref<1x4x8x8xf32, #tpu.memory_space<vmem>>, vector<1x4x8x8xf32>
    %42 = vector.shape_cast %41 : vector<1x4x8x8xf32> to vector<4x8x8xf32>
    %43 = vector.shape_cast %40 : vector<4x8x8xf32> to vector<1x4x8x8xf32>
    tpu.vector_store %arg9[%c0_24, %c0_25, %c0_26, %c0_27], %43 {strides = array<i32>} : memref<1x4x8x8xf32, #tpu.memory_space<vmem>>, vector<1x4x8x8xf32>,
    %44 = arith.truncf %40 : vector<4x8x8xf32> to vector<4x8x8xbf16>
    "tpu.trace_start"() <{level = 10 : i32, message = "hqk,hkd->hqd"}> : () -> ()
    %cst_28 = arith.constant dense<0.000000e+00> : vector<4x8x8xf32>
    %45 = tpu.matmul %44, %28, %cst_28 {dimension_numbers = #tpu.dot_dimension_numbers<[2], [1], [1], [2], [0, 0, 0, 1, 1, 2], [0], [0]>} : vector<4x8x8xbf16>, vector<4x8x8xbf16>, vector<4x8x8xf32> -> vector<4x8x8xf32>
    "tpu.trace_stop"() : () -> ()
    %46 = arith.truncf %45 : vector<4x8x8xf32> to vector<4x8x8xbf16>
    %c0_29 = arith.constant 0 : index
    %c0_30 = arith.constant 0 : index
    %c0_31 = arith.constant 0 : index
    %47 = vector.load %arg7[%c0_29, %c0_30, %c0_31] : memref<4x8x32xbf16, #tpu.memory_space<vmem>>, vector<4x8x32xbf16>
    "tpu.trace_start"() <{level = 10 : i32, message = "hqd,hde->hqe"}> : () -> ()
    %cst_32 = arith.constant dense<0.000000e+00> : vector<4x8x32xf32>
    %48 = tpu.matmul %46, %47, %cst_32 {dimension_numbers = #tpu.dot_dimension_numbers<[2], [1], [1], [2], [0, 0, 0, 1, 1, 2], [0], [0]>} : vector<4x8x8xbf16>, vector<4x8x32xbf16>, vector<4x8x32xf32> -> vector<4x8x32xf32>
    "tpu.trace_stop"() : () -> ()
    %cst_33 = arith.constant dense<0.000000e+00> : vector<8x32xf32>
    %49 = vector.multi_reduction <add>, %48, %cst_33 [0] : vector<4x8x32xf32> to vector<8x32xf32>
    %c0_34 = arith.constant 0 : index
    %c0_35 = arith.constant 0 : index
    %c0_36 = arith.constant 0 : index
    %50 = vector.load %arg8[%c0_34, %c0_35, %c0_36] : memref<1x8x32xf32, #tpu.memory_space<vmem>>, vector<1x8x32xf32>
    %51 = vector.shape_cast %50 : vector<1x8x32xf32> to vector<8x32xf32>
    %52 = vector.shape_cast %49 : vector<8x32xf32> to vector<1x8x32xf32>
    tpu.vector_store %arg8[%c0_34, %c0_35, %c0_36], %52 {strides = array<i32>} : memref<1x8x32xf32, #tpu.memory_space<vmem>>, vector<1x8x32xf32>,
    return
  }
  func.func @transform_0(%arg0: i32) -> (i32, i32, i32) {
    %c0_i32 = arith.constant 0 : i32
    %c0_i32_0 = arith.constant 0 : i32
    %c0_i32_1 = arith.constant 0 : i32
    return %arg0, %c0_i32, %c0_i32_0 : i32, i32, i32
  }
  func.func @transform_1(%arg0: i32) -> (i32, i32, i32) {
    %c0_i32 = arith.constant 0 : i32
    %c0_i32_0 = arith.constant 0 : i32
    %c0_i32_1 = arith.constant 0 : i32
    return %arg0, %c0_i32, %c0_i32_0 : i32, i32, i32
  }
  func.func @transform_2(%arg0: i32) -> (i32, i32, i32) {
    %c0_i32 = arith.constant 0 : i32
    %c0_i32_0 = arith.constant 0 : i32
    %c0_i32_1 = arith.constant 0 : i32
    return %arg0, %c0_i32, %c0_i32_0 : i32, i32, i32
  }
  func.func @transform_3(%arg0: i32) -> (i32, i32, i32) {
    %c0_i32 = arith.constant 0 : i32
    %c0_i32_0 = arith.constant 0 : i32
    %c0_i32_1 = arith.constant 0 : i32
    %c0_i32_2 = arith.constant 0 : i32
    return %c0_i32, %c0_i32_0, %c0_i32_1 : i32, i32, i32
  }
  func.func @transform_4(%arg0: i32) -> (i32, i32, i32) {
    %c0_i32 = arith.constant 0 : i32
    %c0_i32_0 = arith.constant 0 : i32
    %c0_i32_1 = arith.constant 0 : i32
    %c0_i32_2 = arith.constant 0 : i32
    return %c0_i32, %c0_i32_0, %c0_i32_1 : i32, i32, i32
  }
  func.func @transform_5(%arg0: i32) -> (i32, i32, i32) {
    %c0_i32 = arith.constant 0 : i32
    %c0_i32_0 = arith.constant 0 : i32
    %c0_i32_1 = arith.constant 0 : i32
    %c0_i32_2 = arith.constant 0 : i32
    return %c0_i32, %c0_i32_0, %c0_i32_1 : i32, i32, i32
  }
  func.func @transform_6(%arg0: i32) -> (i32, i32, i32) {
    %c0_i32 = arith.constant 0 : i32
    %c0_i32_0 = arith.constant 0 : i32
    %c0_i32_1 = arith.constant 0 : i32
    %c0_i32_2 = arith.constant 0 : i32
    return %c0_i32, %c0_i32_0, %c0_i32_1 : i32, i32, i32
  }
  func.func @transform_7(%arg0: i32) -> (i32, i32, i32) {
    %c0_i32 = arith.constant 0 : i32
    %c0_i32_0 = arith.constant 0 : i32
    %c0_i32_1 = arith.constant 0 : i32
    return %arg0, %c0_i32, %c0_i32_0 : i32, i32, i32
  }
  func.func @transform_8(%arg0: i32) -> (i32, i32, i32, i32) {
    %c0_i32 = arith.constant 0 : i32
    %c0_i32_0 = arith.constant 0 : i32
    %c0_i32_1 = arith.constant 0 : i32
    %c0_i32_2 = arith.constant 0 : i32
    return %arg0, %c0_i32, %c0_i32_0, %c0_i32_1 : i32, i32, i32, i32
  }
}

</mosaic_0001>

<llo_original>
// kernel: tpu_custom_call.1
$region0: #{tpu_custom_call.1}
  #allocation0 [shape = 'u32[]', space=smem, size = 0x4, offset = 0x4, fixed_abs, tag = 'smem constant byte address 0x4 - core index']
  #allocation1 [shape = 'u32[144,128]{1,0:T(1,128)}', space=vmem, size = 0x12000, scoped, tag = 'internal scratch']
  %s0 = inlined_call_operand.vmem [shape: f32[2,8,32], index: 0, kind: input, shape index: {}]
  %s1 = inlined_call_operand.vmem [shape: f32[2,8,32], index: 1, kind: input, shape index: {}]
  %s2 = inlined_call_operand.vmem [shape: f32[2,8,32], index: 2, kind: input, shape index: {}]
  %s3 = inlined_call_operand.vmem [shape: bf16[4,32,8], index: 3, kind: input, shape index: {}]
  %s4 = inlined_call_operand.vmem [shape: bf16[4,32,8], index: 4, kind: input, shape index: {}]
  %s5 = inlined_call_operand.vmem [shape: bf16[4,32,8], index: 5, kind: input, shape index: {}]
  %s6 = inlined_call_operand.vmem [shape: bf16[4,8,32], index: 6, kind: input, shape index: {}]
  %s7 = inlined_call_operand.hbm [shape: f32[2,8,32], index: 7, kind: output, shape index: {0}]
  %s8 = inlined_call_operand.hbm [shape: f32[2,4,8,8], index: 8, kind: output, shape index: {1}]
  %9 = xla_tuple %s7, %s8
  %s10 = sld [smem:[#allocation0]]
  $region69: #{tpu_custom_call.1} parent=0
    _
  %s12 = ssub.s32 1, %s10
  %s13 = scalar_select 0, %s12, %s10
  $region1: #{tpu_custom_call.1} parent=0
    #allocation2 [shape = 'u8[8192]{0}', space=vmem, size = 0x2000, scoped, tag = 'output window, operand 0']
    #allocation3 [shape = 's32[2]{0}', space=sflag, size = 0x8, scoped, tag = 'scoped memory for tpu_custom_call.1']
    #allocation4 [shape = 'u8[32768]{0}', space=vmem, size = 0x8000, scoped, tag = 'output window, operand 1']
    #allocation5 [shape = 's32[2]{0}', space=sflag, size = 0x8, scoped, tag = 'scoped memory for tpu_custom_call.1']
    %14 = vsyncpa [#allocation3], 0
    %s15 = scalar_lea.sflag [#allocation3], 1
    %16 = vsyncpa %s15, 0
    %17 = vsyncpa [#allocation5], 0
    %s18 = scalar_lea.sflag [#allocation5], 1
    %19 = vsyncpa %s18, 0
    loop: start=0, step=1, limit=4
    $region2: #{tpu_custom_call.1} parent=1 // loop_pre_header
      _
    $region3: #{tpu_custom_call.1} parent=1 // loop_header
      %s21 = sphi 0, %s25
      %p22 = scmp.ge.s32.totalorder %s21, 4
      %s31 = sphi 0, %s33
      %s34 = sphi 0, %s31
      %s35 = sphi 0, %s34
      %s51 = sphi 0, %s35
      %s57 = sphi 0, %s59
      %s60 = sphi 0, %s57
      %s61 = sphi 0, %s60
      %s77 = sphi 0, %s61
      %s83 = sphi 0, %s85
      %s86 = sphi 0, %s83
      %s87 = sphi 0, %s86
      %s103 = sphi 0, %s87
      %s107 = sphi 0, %s107
      %s109 = sphi 0, %s107
      %s110 = sphi 0, %s109
      %s124 = sphi 0, %s110
      %s128 = sphi 0, %s128
      %s130 = sphi 0, %s128
      %s131 = sphi 0, %s130
      %s145 = sphi 0, %s131
      %s149 = sphi 0, %s149
      %s151 = sphi 0, %s149
      %s152 = sphi 0, %s151
      %s166 = sphi 0, %s152
      %s170 = sphi 0, %s170
      %s172 = sphi 0, %s170
      %s173 = sphi 0, %s172
      %s187 = sphi 0, %s173
      %s193 = sphi 0, %s195
      %s196 = sphi 0, %s193
      %s197 = sphi 0, %s196
      %s213 = sphi 0, %s197
      %s219 = sphi 0, %s221
      %s222 = sphi 0, %s219
      %s223 = sphi 0, %s222
      %s239 = sphi 0, %s223
    $region4: #{tpu_custom_call.1} parent=1 // loop_header_branch
      %24 = sbr.rel (%p22) target = $region8
    $region5: #{tpu_custom_call.1} parent=1 // loop_body
      %s26 = ssub.s32 %s21, 1
      %s27 = ssub.s32 %s21, 2
      %s28 = sadd.s32 %s21, 1
      %s29 = ssub.s32 %s21, %s28
      %p30 = scmp.eq.s32.totalorder %s29, 0
      %s32 = sadd.s32 %s31, 1
      %s33 = scalar_select %p30, %s31, %s32
      %p36 = pneg %p30
      %p37 = scmp.eq.s32.totalorder %s21, 1
      %p38 = por %p36, %p37
      %p39 = scmp.ne.s32.totalorder %s31, %s34
      %p40 = scmp.eq.s32.totalorder %s21, 0
      %p41 = por %p39, %p40
      %p42 = scmp.ne.s32.totalorder %s31, %s34
      %p43 = scmp.eq.s32.totalorder %s26, 1
      %p44 = por %p42, %p43
      %p45 = scmp.ne.s32.totalorder %s34, %s35
      %p46 = scmp.eq.s32.totalorder %s26, 0
      %p47 = por %p45, %p46
      %p48 = scmp.ne.s32.totalorder %s34, %s35
      %p49 = scmp.eq.s32.totalorder %s27, 1
      %p50 = por %p48, %p49
      %p52 = scmp.ne.s32.totalorder %s35, %s51
      %p53 = scmp.eq.s32.totalorder %s27, 0
      %p54 = por %p52, %p53
      %s55 = ssub.s32 %s21, %s28
      %p56 = scmp.eq.s32.totalorder %s55, 0
      %s58 = sadd.s32 %s57, 1
      %s59 = scalar_select %p56, %s57, %s58
      %p62 = pneg %p56
      %p63 = scmp.eq.s32.totalorder %s21, 1
      %p64 = por %p62, %p63
      %p65 = scmp.ne.s32.totalorder %s57, %s60
      %p66 = scmp.eq.s32.totalorder %s21, 0
      %p67 = por %p65, %p66
      %p68 = scmp.ne.s32.totalorder %s57, %s60
      %p69 = scmp.eq.s32.totalorder %s26, 1
      %p70 = por %p68, %p69
      %p71 = scmp.ne.s32.totalorder %s60, %s61
      %p72 = scmp.eq.s32.totalorder %s26, 0
      %p73 = por %p71, %p72
      %p74 = scmp.ne.s32.totalorder %s60, %s61
      %p75 = scmp.eq.s32.totalorder %s27, 1
      %p76 = por %p74, %p75
      %p78 = scmp.ne.s32.totalorder %s61, %s77
      %p79 = scmp.eq.s32.totalorder %s27, 0
      %p80 = por %p78, %p79
      %s81 = ssub.s32 %s21, %s28
      %p82 = scmp.eq.s32.totalorder %s81, 0
      %s84 = sadd.s32 %s83, 1
      %s85 = scalar_select %p82, %s83, %s84
      %p88 = pneg %p82
      %p89 = scmp.eq.s32.totalorder %s21, 1
      %p90 = por %p88, %p89
      %p91 = scmp.ne.s32.totalorder %s83, %s86
      %p92 = scmp.eq.s32.totalorder %s21, 0
      %p93 = por %p91, %p92
      %p94 = scmp.ne.s32.totalorder %s83, %s86
      %p95 = scmp.eq.s32.totalorder %s26, 1
      %p96 = por %p94, %p95
      %p97 = scmp.ne.s32.totalorder %s86, %s87
      %p98 = scmp.eq.s32.totalorder %s26, 0
      %p99 = por %p97, %p98
      %p100 = scmp.ne.s32.totalorder %s86, %s87
      %p101 = scmp.eq.s32.totalorder %s27, 1
      %p102 = por %p100, %p101
      %p104 = scmp.ne.s32.totalorder %s87, %s103
      %p105 = scmp.eq.s32.totalorder %s27, 0
      %p106 = por %p104, %p105
      %s108 = sadd.s32 %s107, 1
      %p111 = scmp.eq.s32.totalorder %s21, 1
      %p112 = scmp.ne.s32.totalorder %s107, %s109
      %p113 = scmp.eq.s32.totalorder %s21, 0
      %p114 = por %p112, %p113
      %p115 = scmp.ne.s32.totalorder %s107, %s109
      %p116 = scmp.eq.s32.totalorder %s26, 1
      %p117 = por %p115, %p116
      %p118 = scmp.ne.s32.totalorder %s109, %s110
      %p119 = scmp.eq.s32.totalorder %s26, 0
      %p120 = por %p118, %p119
      %p121 = scmp.ne.s32.totalorder %s109, %s110
      %p122 = scmp.eq.s32.totalorder %s27, 1
      %p123 = por %p121, %p122
      %p125 = scmp.ne.s32.totalorder %s110, %s124
      %p126 = scmp.eq.s32.totalorder %s27, 0
      %p127 = por %p125, %p126
      %s129 = sadd.s32 %s128, 1
      %p132 = scmp.eq.s32.totalorder %s21, 1
      %p133 = scmp.ne.s32.totalorder %s128, %s130
      %p134 = scmp.eq.s32.totalorder %s21, 0
      %p135 = por %p133, %p134
      %p136 = scmp.ne.s32.totalorder %s128, %s130
      %p137 = scmp.eq.s32.totalorder %s26, 1
      %p138 = por %p136, %p137
      %p139 = scmp.ne.s32.totalorder %s130, %s131
      %p140 = scmp.eq.s32.totalorder %s26, 0
      %p141 = por %p139, %p140
      %p142 = scmp.ne.s32.totalorder %s130, %s131
      %p143 = scmp.eq.s32.totalorder %s27, 1
      %p144 = por %p142, %p143
      %p146 = scmp.ne.s32.totalorder %s131, %s145
      %p147 = scmp.eq.s32.totalorder %s27, 0
      %p148 = por %p146, %p147
      %s150 = sadd.s32 %s149, 1
      %p153 = scmp.eq.s32.totalorder %s21, 1
      %p154 = scmp.ne.s32.totalorder %s149, %s151
      %p155 = scmp.eq.s32.totalorder %s21, 0
      %p156 = por %p154, %p155
      %p157 = scmp.ne.s32.totalorder %s149, %s151
      %p158 = scmp.eq.s32.totalorder %s26, 1
      %p159 = por %p157, %p158
      %p160 = scmp.ne.s32.totalorder %s151, %s152
      %p161 = scmp.eq.s32.totalorder %s26, 0
      %p162 = por %p160, %p161
      %p163 = scmp.ne.s32.totalorder %s151, %s152
      %p164 = scmp.eq.s32.totalorder %s27, 1
      %p165 = por %p163, %p164
      %p167 = scmp.ne.s32.totalorder %s152, %s166
      %p168 = scmp.eq.s32.totalorder %s27, 0
      %p169 = por %p167, %p168
      %s171 = sadd.s32 %s170, 1
      %p174 = scmp.eq.s32.totalorder %s21, 1
      %p175 = scmp.ne.s32.totalorder %s170, %s172
      %p176 = scmp.eq.s32.totalorder %s21, 0
      %p177 = por %p175, %p176
      %p178 = scmp.ne.s32.totalorder %s170, %s172
      %p179 = scmp.eq.s32.totalorder %s26, 1
      %p180 = por %p178, %p179
      %p181 = scmp.ne.s32.totalorder %s172, %s173
      %p182 = scmp.eq.s32.totalorder %s26, 0
      %p183 = por %p181, %p182
      %p184 = scmp.ne.s32.totalorder %s172, %s173
      %p185 = scmp.eq.s32.totalorder %s27, 1
      %p186 = por %p184, %p185
      %p188 = scmp.ne.s32.totalorder %s173, %s187
      %p189 = scmp.eq.s32.totalorder %s27, 0
      %p190 = por %p188, %p189
      %s191 = ssub.s32 %s21, %s28
      %p192 = scmp.eq.s32.totalorder %s191, 0
      %s194 = sadd.s32 %s193, 1
      %s195 = scalar_select %p192, %s193, %s194
      %p198 = pneg %p192
      %p199 = scmp.eq.s32.totalorder %s21, 1
      %p200 = por %p198, %p199
      %p201 = scmp.ne.s32.totalorder %s193, %s196
      %p202 = scmp.eq.s32.totalorder %s21, 0
      %p203 = por %p201, %p202
      %p204 = scmp.ne.s32.totalorder %s193, %s196
      %p205 = scmp.eq.s32.totalorder %s26, 1
      %p206 = por %p204, %p205
      %p207 = scmp.ne.s32.totalorder %s196, %s197
      %p208 = scmp.eq.s32.totalorder %s26, 0
      %p209 = por %p207, %p208
      %p210 = scmp.ne.s32.totalorder %s196, %s197
      %p211 = scmp.eq.s32.totalorder %s27, 1
      %p212 = por %p210, %p211
      %p214 = scmp.ne.s32.totalorder %s197, %s213
      %p215 = scmp.eq.s32.totalorder %s27, 0
      %p216 = por %p214, %p215
      %s217 = ssub.s32 %s21, %s28
      %p218 = scmp.eq.s32.totalorder %s217, 0
      %s220 = sadd.s32 %s219, 1
      %s221 = scalar_select %p218, %s219, %s220
      %p224 = pneg %p218
      %p225 = scmp.eq.s32.totalorder %s21, 1
      %p226 = por %p224, %p225
      %p227 = scmp.ne.s32.totalorder %s219, %s222
      %p228 = scmp.eq.s32.totalorder %s21, 0
      %p229 = por %p227, %p228
      %p230 = scmp.ne.s32.totalorder %s219, %s222
      %p231 = scmp.eq.s32.totalorder %s26, 1
      %p232 = por %p230, %p231
      %p233 = scmp.ne.s32.totalorder %s222, %s223
      %p234 = scmp.eq.s32.totalorder %s26, 0
      %p235 = por %p233, %p234
      %p236 = scmp.ne.s32.totalorder %s222, %s223
      %p237 = scmp.eq.s32.totalorder %s27, 1
      %p238 = por %p236, %p237
      %p240 = scmp.ne.s32.totalorder %s223, %s239
      %p241 = scmp.eq.s32.totalorder %s27, 0
      %p242 = por %p240, %p241
      %p243 = scmp.le.s32.totalorder 1, %s21
      %p244 = scmp.lt.s32.totalorder %s21, 3
      %p245 = pnand %p243, %p244
      %p246 = pneg %p245
      // Predicated region
      $region9: #{tpu_custom_call.1} parent=5 // pred_check
        _
      $region10: #{tpu_custom_call.1} parent=5 // pred_check_branch
        %248 = sbr.rel (%p245) target = $region12
      $region11: #{tpu_custom_call.1} parent=5 // pred_region
        %s249 = ssub.s32 %s21, 1
        // Predicated region
        $region13: #{tpu_custom_call.1} parent=11 // pred_check
          %p250 = pneg %p120
        $region14: #{tpu_custom_call.1} parent=11 // pred_check_branch
          %252 = sbr.rel (%p250) target = $region16
        $region15: #{tpu_custom_call.1} parent=11 // pred_region
          _
        $region16: #{tpu_custom_call.1} parent=11 // pred_fallthru
          _
        // Predicated region
        $region17: #{tpu_custom_call.1} parent=11 // pred_check
          %p253 = pneg %p141
        $region18: #{tpu_custom_call.1} parent=11 // pred_check_branch
          %255 = sbr.rel (%p253) target = $region20
        $region19: #{tpu_custom_call.1} parent=11 // pred_region
          _
        $region20: #{tpu_custom_call.1} parent=11 // pred_fallthru
          _
        // Predicated region
        $region21: #{tpu_custom_call.1} parent=11 // pred_check
          %p256 = pneg %p162
        $region22: #{tpu_custom_call.1} parent=11 // pred_check_branch
          %258 = sbr.rel (%p256) target = $region24
        $region23: #{tpu_custom_call.1} parent=11 // pred_region
          _
        $region24: #{tpu_custom_call.1} parent=11 // pred_fallthru
          _
        // Predicated region
        $region25: #{tpu_custom_call.1} parent=11 // pred_check
          %p259 = pneg %p183
        $region26: #{tpu_custom_call.1} parent=11 // pred_check_branch
          %261 = sbr.rel (%p259) target = $region28
        $region27: #{tpu_custom_call.1} parent=11 // pred_region
          _
        $region28: #{tpu_custom_call.1} parent=11 // pred_fallthru
          _
      $region12: #{tpu_custom_call.1} parent=5 // pred_fallthru
        _
      %p262 = scmp.lt.s32.totalorder %s21, 2
      // Predicated region
      $region29: #{tpu_custom_call.1} parent=5 // pred_check
        %p263 = pneg %p262
      $region30: #{tpu_custom_call.1} parent=5 // pred_check_branch
        %265 = sbr.rel (%p263) target = $region32
      $region31: #{tpu_custom_call.1} parent=5 // pred_region
        // Predicated region
        $region33: #{tpu_custom_call.1} parent=31 // pred_check
          %p266 = pneg %p41
        $region34: #{tpu_custom_call.1} parent=31 // pred_check_branch
          %268 = sbr.rel (%p266) target = $region36
        $region35: #{tpu_custom_call.1} parent=31 // pred_region
          %p269 = scmp.lt.s32.totalorder %s21, 1
          %s270 = scalar_select %p269, %s21, 1
          %s271 = smul.addr %s270, 8
          %s272 = scalar_lea.vmem %s0, %s271
        $region36: #{tpu_custom_call.1} parent=31 // pred_fallthru
          _
        // Predicated region
        $region37: #{tpu_custom_call.1} parent=31 // pred_check
          %p273 = pneg %p67
        $region38: #{tpu_custom_call.1} parent=31 // pred_check_branch
          %275 = sbr.rel (%p273) target = $region40
        $region39: #{tpu_custom_call.1} parent=31 // pred_region
          %p276 = scmp.lt.s32.totalorder %s21, 1
          %s277 = scalar_select %p276, %s21, 1
          %s278 = smul.addr %s277, 8
          %s279 = scalar_lea.vmem %s1, %s278
        $region40: #{tpu_custom_call.1} parent=31 // pred_fallthru
          _
        // Predicated region
        $region41: #{tpu_custom_call.1} parent=31 // pred_check
          %p280 = pneg %p93
        $region42: #{tpu_custom_call.1} parent=31 // pred_check_branch
          %282 = sbr.rel (%p280) target = $region44
        $region43: #{tpu_custom_call.1} parent=31 // pred_region
          %p283 = scmp.lt.s32.totalorder %s21, 1
          %s284 = scalar_select %p283, %s21, 1
          %s285 = smul.addr %s284, 8
          %s286 = scalar_lea.vmem %s2, %s285
        $region44: #{tpu_custom_call.1} parent=31 // pred_fallthru
          _
      $region32: #{tpu_custom_call.1} parent=5 // pred_fallthru
        _
      %p287 = scmp.le.s32.totalorder 1, %s21
      %p288 = scmp.lt.s32.totalorder %s21, 3
      %p289 = pnand %p287, %p288
      %p290 = pneg %p289
      // Predicated region
      $region45: #{tpu_custom_call.1} parent=5 // pred_check
        _
      $region46: #{tpu_custom_call.1} parent=5 // pred_check_branch
        %292 = sbr.rel (%p289) target = $region48
      $region47: #{tpu_custom_call.1} parent=5 // pred_region
        %s293 = ssub.s32 %s21, 1
        %p294 = scmp.lt.s32.totalorder %s26, 1
        %s295 = scalar_select %p294, %s26, 1
        %s296 = smul.addr %s295, 8
        %s297 = scalar_lea.vmem %s0, %s296
        %p298 = pneg %p47
        %p299 = pneg %p44
        %p300 = scmp.lt.s32.totalorder %s26, 1
        %s301 = scalar_select %p300, %s26, 1
        %s302 = smul.addr %s301, 8
        %s303 = scalar_lea.vmem %s1, %s302
        %p304 = pneg %p73
        %p305 = pneg %p70
        %p306 = scmp.lt.s32.totalorder %s26, 1
        %s307 = scalar_select %p306, %s26, 1
        %s308 = smul.addr %s307, 8
        %s309 = scalar_lea.vmem %s2, %s308
        %p310 = pneg %p99
        %p311 = pneg %p96
        %p312 = pneg %p120
        %p313 = pneg %p117
        %p314 = pneg %p141
        %p315 = pneg %p138
        %p316 = pneg %p162
        %p317 = pneg %p159
        %p318 = pneg %p183
        %p319 = pneg %p180
        %p320 = pneg %p209
        %p321 = pneg %p206
        %s322 = sand.u32 %s196, 1
        %s323 = scalar_lea.sflag [#allocation3], %s322
        %s324 = sand.u32 %s196, 1
        %s325 = smul.addr %s324, 8
        %s326 = scalar_lea.vmem [#allocation2], %s325
        %p327 = pneg %p235
        %p328 = pneg %p232
        %s329 = sand.u32 %s222, 1
        %s330 = scalar_lea.sflag [#allocation5], %s329
        %s331 = sand.u32 %s222, 1
        %s332 = smul.addr %s331, 32
        %s333 = scalar_lea.vmem [#allocation4], %s332
        %p334 = scmp.lt.s32.totalorder %s26, 1
        %s335 = scalar_select %p334, %s26, 1
        %s336 = smul.addr %s335, 8
        %s337 = scalar_lea.vmem %s0, %s336
        %p338 = scmp.lt.s32.totalorder %s26, 1
        %s339 = scalar_select %p338, %s26, 1
        %s340 = smul.addr %s339, 8
        %s341 = scalar_lea.vmem %s1, %s340
        %p342 = scmp.lt.s32.totalorder %s26, 1
        %s343 = scalar_select %p342, %s26, 1
        %s344 = smul.addr %s343, 8
        %s345 = scalar_lea.vmem %s2, %s344
        %v347 = vld [vmem:[%s337] sm:$0xff]
        %v348 = vpack.c.bf16 %v347, %v347
        %v349 = vld [vmem:[%s341] sm:$0xff]
        %v350 = vpack.c.bf16 %v349, %v349
        %v351 = vld [vmem:[%s345] sm:$0xff]
        %v352 = vpack.c.bf16 %v351, %v351
        %v353 = vld [vmem:[%s3] sm:$0xf]
        %v354 = vld [vmem:[%s3 + $0x4] sm:$0xf]
        %v355 = vld [vmem:[%s3 + $0x8] sm:$0xf]
        %v356 = vld [vmem:[%s3 + $0xc] sm:$0xf]
        %v357 = vld [vmem:[%s3 + $0x10] sm:$0xf]
        %v358 = vld [vmem:[%s3 + $0x14] sm:$0xf]
        %v359 = vld [vmem:[%s3 + $0x18] sm:$0xf]
        %v360 = vld [vmem:[%s3 + $0x1c] sm:$0xf]
        %v361 = vld [vmem:[%s3 + $0x20] sm:$0xf]
        %v362 = vld [vmem:[%s3 + $0x24] sm:$0xf]
        %v363 = vld [vmem:[%s3 + $0x28] sm:$0xf]
        %v364 = vld [vmem:[%s3 + $0x2c] sm:$0xf]
        %v365 = vld [vmem:[%s3 + $0x30] sm:$0xf]
        %v366 = vld [vmem:[%s3 + $0x34] sm:$0xf]
        %v367 = vld [vmem:[%s3 + $0x38] sm:$0xf]
        %v368 = vld [vmem:[%s3 + $0x3c] sm:$0xf]
        %v373 = vunpack.c.l.b16 %v353
        %v374 = vunpack.c.l.b16 %v354
        %v375 = vunpack.c.l.b16 %v355
        %v376 = vunpack.c.l.b16 %v356
        %v377 = vpack.c.b16 %v374, %v373
        %v378 = vpack.c.b16 %v376, %v375
        %vm381 = vcmask 261120
        %v383 = vsel %vm381, %v348, 0
        %385 = vmatprep.subr.bf16.mxu0 0
        %386 = vmatpush1.bf16.msra.mxu0 %v377
        %387 = vmatprep.subr.bf16.mxu0 0
        %388 = vmatpush1.bf16.msra.mxu0 %v378
        %389 = vmatprep.subr.bf16.mxu0 0
        %390 = vmatpush1.bf16.msra.mxu0 0
        %391 = vmatprep.subr.bf16.mxu0 0
        %392 = vmatpush1.bf16.msra.mxu0 0
        %393 = vmatprep.subr.bf16.mxu0 0
        %394 = vmatpush1.bf16.msra.mxu0 0
        %395 = vmatprep.subr.bf16.mxu0 0
        %396 = vmatpush1.bf16.msra.mxu0 0
        %397 = vmatprep.subr.bf16.mxu0 0
        %398 = vmatpush1.bf16.msra.mxu0 0
        %399 = vmatprep.subr.bf16.mxu0 0
        %400 = vmatpush1.bf16.msra.mxu0 0
        %401 = vmatprep.subr.bf16.mxu0 0
        %402 = vmatpush1.bf16.msra.mxu0 0
        %403 = vmatprep.subr.bf16.mxu0 0
        %404 = vmatpush1.bf16.msra.mxu0 0
        %405 = vmatprep.subr.bf16.mxu0 0
        %406 = vmatpush1.bf16.msra.mxu0 0
        %407 = vmatprep.subr.bf16.mxu0 0
        %408 = vmatpush1.bf16.msra.mxu0 0
        %409 = vmatprep.subr.bf16.mxu0 0
        %410 = vmatpush1.bf16.msra.mxu0 0
        %411 = vmatprep.subr.bf16.mxu0 0
        %412 = vmatpush1.bf16.msra.mxu0 0
        %413 = vmatprep.subr.bf16.mxu0 0
        %414 = vmatpush1.bf16.msra.mxu0 0
        %415 = vmatprep.subr.bf16.mxu0 0
        %416 = vmatpush1.bf16.msra.mxu0 0
        %417 = vmatprep.mubr.bf16.mxu0 0
        %418 = vmatmul.mubr.bf16.gmra.mrb[0].mxu0 %v383
        %v419 = vpop.f32.mrb[0].mxu0
        %v420 = vadd.f32 0.0, %v419
        %v421 = vpop.f32.mrb[0].mxu0
        %v422 = vpop.f32.mrb[0].mxu0
        %v423 = vpop.f32.mrb[0].mxu0
        %424 = vdwg.mxu0
        %v429 = vunpack.c.l.b16 %v357
        %v430 = vunpack.c.l.b16 %v358
        %v431 = vunpack.c.l.b16 %v359
        %v432 = vunpack.c.l.b16 %v360
        %v433 = vpack.c.b16 %v430, %v429
        %v434 = vpack.c.b16 %v432, %v431
        %437 = vmatprep.subr.bf16.mxu0 0
        %438 = vmatpush1.bf16.msra.mxu0 %v433
        %439 = vmatprep.subr.bf16.mxu0 0
        %440 = vmatpush1.bf16.msra.mxu0 %v434
        %441 = vmatprep.subr.bf16.mxu0 0
        %442 = vmatpush1.bf16.msra.mxu0 0
        %443 = vmatprep.subr.bf16.mxu0 0
        %444 = vmatpush1.bf16.msra.mxu0 0
        %445 = vmatprep.subr.bf16.mxu0 0
        %446 = vmatpush1.bf16.msra.mxu0 0
        %447 = vmatprep.subr.bf16.mxu0 0
        %448 = vmatpush1.bf16.msra.mxu0 0
        %449 = vmatprep.subr.bf16.mxu0 0
        %450 = vmatpush1.bf16.msra.mxu0 0
        %451 = vmatprep.subr.bf16.mxu0 0
        %452 = vmatpush1.bf16.msra.mxu0 0
        %453 = vmatprep.subr.bf16.mxu0 0
        %454 = vmatpush1.bf16.msra.mxu0 0
        %455 = vmatprep.subr.bf16.mxu0 0
        %456 = vmatpush1.bf16.msra.mxu0 0
        %457 = vmatprep.subr.bf16.mxu0 0
        %458 = vmatpush1.bf16.msra.mxu0 0
        %459 = vmatprep.subr.bf16.mxu0 0
        %460 = vmatpush1.bf16.msra.mxu0 0
        %461 = vmatprep.subr.bf16.mxu0 0
        %462 = vmatpush1.bf16.msra.mxu0 0
        %463 = vmatprep.subr.bf16.mxu0 0
        %464 = vmatpush1.bf16.msra.mxu0 0
        %465 = vmatprep.subr.bf16.mxu0 0
        %466 = vmatpush1.bf16.msra.mxu0 0
        %467 = vmatprep.subr.bf16.mxu0 0
        %468 = vmatpush1.bf16.msra.mxu0 0
        %469 = vmatprep.mubr.bf16.mxu0 0
        %470 = vmatmul.mubr.bf16.gmra.mrb[0].mxu0 %v383
        %v471 = vpop.f32.mrb[0].mxu0
        %v472 = vadd.f32 0.0, %v471
        %v473 = vpop.f32.mrb[0].mxu0
        %v474 = vpop.f32.mrb[0].mxu0
        %v475 = vpop.f32.mrb[0].mxu0
        %476 = vdwg.mxu0
        %v481 = vunpack.c.l.b16 %v361
        %v482 = vunpack.c.l.b16 %v362
        %v483 = vunpack.c.l.b16 %v363
        %v484 = vunpack.c.l.b16 %v364
        %v485 = vpack.c.b16 %v482, %v481
        %v486 = vpack.c.b16 %v484, %v483
        %489 = vmatprep.subr.bf16.mxu0 0
        %490 = vmatpush1.bf16.msra.mxu0 %v485
        %491 = vmatprep.subr.bf16.mxu0 0
        %492 = vmatpush1.bf16.msra.mxu0 %v486
        %493 = vmatprep.subr.bf16.mxu0 0
        %494 = vmatpush1.bf16.msra.mxu0 0
        %495 = vmatprep.subr.bf16.mxu0 0
        %496 = vmatpush1.bf16.msra.mxu0 0
        %497 = vmatprep.subr.bf16.mxu0 0
        %498 = vmatpush1.bf16.msra.mxu0 0
        %499 = vmatprep.subr.bf16.mxu0 0
        %500 = vmatpush1.bf16.msra.mxu0 0
        %501 = vmatprep.subr.bf16.mxu0 0
        %502 = vmatpush1.bf16.msra.mxu0 0
        %503 = vmatprep.subr.bf16.mxu0 0
        %504 = vmatpush1.bf16.msra.mxu0 0
        %505 = vmatprep.subr.bf16.mxu0 0
        %506 = vmatpush1.bf16.msra.mxu0 0
        %507 = vmatprep.subr.bf16.mxu0 0
        %508 = vmatpush1.bf16.msra.mxu0 0
        %509 = vmatprep.subr.bf16.mxu0 0
        %510 = vmatpush1.bf16.msra.mxu0 0
        %511 = vmatprep.subr.bf16.mxu0 0
        %512 = vmatpush1.bf16.msra.mxu0 0
        %513 = vmatprep.subr.bf16.mxu0 0
        %514 = vmatpush1.bf16.msra.mxu0 0
        %515 = vmatprep.subr.bf16.mxu0 0
        %516 = vmatpush1.bf16.msra.mxu0 0
        %517 = vmatprep.subr.bf16.mxu0 0
        %518 = vmatpush1.bf16.msra.mxu0 0
        %519 = vmatprep.subr.bf16.mxu0 0
        %520 = vmatpush1.bf16.msra.mxu0 0
        %521 = vmatprep.mubr.bf16.mxu0 0
        %522 = vmatmul.mubr.bf16.gmra.mrb[0].mxu0 %v383
        %v523 = vpop.f32.mrb[0].mxu0
        %v524 = vadd.f32 0.0, %v523
        %v525 = vpop.f32.mrb[0].mxu0
        %v526 = vpop.f32.mrb[0].mxu0
        %v527 = vpop.f32.mrb[0].mxu0
        %528 = vdwg.mxu0
        %v533 = vunpack.c.l.b16 %v365
        %v534 = vunpack.c.l.b16 %v366
        %v535 = vunpack.c.l.b16 %v367
        %v536 = vunpack.c.l.b16 %v368
        %v537 = vpack.c.b16 %v534, %v533
        %v538 = vpack.c.b16 %v536, %v535
        %541 = vmatprep.subr.bf16.mxu0 0
        %542 = vmatpush1.bf16.msra.mxu0 %v537
        %543 = vmatprep.subr.bf16.mxu0 0
        %544 = vmatpush1.bf16.msra.mxu0 %v538
        %545 = vmatprep.subr.bf16.mxu0 0
        %546 = vmatpush1.bf16.msra.mxu0 0
        %547 = vmatprep.subr.bf16.mxu0 0
        %548 = vmatpush1.bf16.msra.mxu0 0
        %549 = vmatprep.subr.bf16.mxu0 0
        %550 = vmatpush1.bf16.msra.mxu0 0
        %551 = vmatprep.subr.bf16.mxu0 0
        %552 = vmatpush1.bf16.msra.mxu0 0
        %553 = vmatprep.subr.bf16.mxu0 0
        %554 = vmatpush1.bf16.msra.mxu0 0
        %555 = vmatprep.subr.bf16.mxu0 0
        %556 = vmatpush1.bf16.msra.mxu0 0
        %557 = vmatprep.subr.bf16.mxu0 0
        %558 = vmatpush1.bf16.msra.mxu0 0
        %559 = vmatprep.subr.bf16.mxu0 0
        %560 = vmatpush1.bf16.msra.mxu0 0
        %561 = vmatprep.subr.bf16.mxu0 0
        %562 = vmatpush1.bf16.msra.mxu0 0
        %563 = vmatprep.subr.bf16.mxu0 0
        %564 = vmatpush1.bf16.msra.mxu0 0
        %565 = vmatprep.subr.bf16.mxu0 0
        %566 = vmatpush1.bf16.msra.mxu0 0
        %567 = vmatprep.subr.bf16.mxu0 0
        %568 = vmatpush1.bf16.msra.mxu0 0
        %569 = vmatprep.subr.bf16.mxu0 0
        %570 = vmatpush1.bf16.msra.mxu0 0
        %571 = vmatprep.subr.bf16.mxu0 0
        %572 = vmatpush1.bf16.msra.mxu0 0
        %573 = vmatprep.mubr.bf16.mxu0 0
        %574 = vmatmul.mubr.bf16.gmra.mrb[0].mxu0 %v383
        %v575 = vpop.f32.mrb[0].mxu0
        %v576 = vadd.f32 0.0, %v575
        %v577 = vpop.f32.mrb[0].mxu0
        %v578 = vpop.f32.mrb[0].mxu0
        %v579 = vpop.f32.mrb[0].mxu0
        %580 = vdwg.mxu0
        %v581 = vld [vmem:[%s4] sm:$0xf]
        %v582 = vld [vmem:[%s4 + $0x4] sm:$0xf]
        %v583 = vld [vmem:[%s4 + $0x8] sm:$0xf]
        %v584 = vld [vmem:[%s4 + $0xc] sm:$0xf]
        %v585 = vld [vmem:[%s4 + $0x10] sm:$0xf]
        %v586 = vld [vmem:[%s4 + $0x14] sm:$0xf]
        %v587 = vld [vmem:[%s4 + $0x18] sm:$0xf]
        %v588 = vld [vmem:[%s4 + $0x1c] sm:$0xf]
        %v589 = vld [vmem:[%s4 + $0x20] sm:$0xf]
        %v590 = vld [vmem:[%s4 + $0x24] sm:$0xf]
        %v591 = vld [vmem:[%s4 + $0x28] sm:$0xf]
        %v592 = vld [vmem:[%s4 + $0x2c] sm:$0xf]
        %v593 = vld [vmem:[%s4 + $0x30] sm:$0xf]
        %v594 = vld [vmem:[%s4 + $0x34] sm:$0xf]
        %v595 = vld [vmem:[%s4 + $0x38] sm:$0xf]
        %v596 = vld [vmem:[%s4 + $0x3c] sm:$0xf]
        %v601 = vunpack.c.l.b16 %v581
        %v602 = vunpack.c.l.b16 %v582
        %v603 = vunpack.c.l.b16 %v583
        %v604 = vunpack.c.l.b16 %v584
        %v605 = vpack.c.b16 %v602, %v601
        %v606 = vpack.c.b16 %v604, %v603
        %v610 = vsel %vm381, %v350, 0
        %612 = vmatprep.subr.bf16.mxu0 0
        %613 = vmatpush1.bf16.msra.mxu0 %v605
        %614 = vmatprep.subr.bf16.mxu0 0
        %615 = vmatpush1.bf16.msra.mxu0 %v606
        %616 = vmatprep.subr.bf16.mxu0 0
        %617 = vmatpush1.bf16.msra.mxu0 0
        %618 = vmatprep.subr.bf16.mxu0 0
        %619 = vmatpush1.bf16.msra.mxu0 0
        %620 = vmatprep.subr.bf16.mxu0 0
        %621 = vmatpush1.bf16.msra.mxu0 0
        %622 = vmatprep.subr.bf16.mxu0 0
        %623 = vmatpush1.bf16.msra.mxu0 0
        %624 = vmatprep.subr.bf16.mxu0 0
        %625 = vmatpush1.bf16.msra.mxu0 0
        %626 = vmatprep.subr.bf16.mxu0 0
        %627 = vmatpush1.bf16.msra.mxu0 0
        %628 = vmatprep.subr.bf16.mxu0 0
        %629 = vmatpush1.bf16.msra.mxu0 0
        %630 = vmatprep.subr.bf16.mxu0 0
        %631 = vmatpush1.bf16.msra.mxu0 0
        %632 = vmatprep.subr.bf16.mxu0 0
        %633 = vmatpush1.bf16.msra.mxu0 0
        %634 = vmatprep.subr.bf16.mxu0 0
        %635 = vmatpush1.bf16.msra.mxu0 0
        %636 = vmatprep.subr.bf16.mxu0 0
        %637 = vmatpush1.bf16.msra.mxu0 0
        %638 = vmatprep.subr.bf16.mxu0 0
        %639 = vmatpush1.bf16.msra.mxu0 0
        %640 = vmatprep.subr.bf16.mxu0 0
        %641 = vmatpush1.bf16.msra.mxu0 0
        %642 = vmatprep.subr.bf16.mxu0 0
        %643 = vmatpush1.bf16.msra.mxu0 0
        %644 = vmatprep.mubr.bf16.mxu0 0
        %645 = vmatmul.mubr.bf16.gmra.mrb[0].mxu0 %v610
        %v646 = vpop.f32.mrb[0].mxu0
        %v647 = vadd.f32 0.0, %v646
        %v648 = vpop.f32.mrb[0].mxu0
        %v649 = vpop.f32.mrb[0].mxu0
        %v650 = vpop.f32.mrb[0].mxu0
        %651 = vdwg.mxu0
        %v656 = vunpack.c.l.b16 %v585
        %v657 = vunpack.c.l.b16 %v586
        %v658 = vunpack.c.l.b16 %v587
        %v659 = vunpack.c.l.b16 %v588
        %v660 = vpack.c.b16 %v657, %v656
        %v661 = vpack.c.b16 %v659, %v658
        %664 = vmatprep.subr.bf16.mxu0 0
        %665 = vmatpush1.bf16.msra.mxu0 %v660
        %666 = vmatprep.subr.bf16.mxu0 0
        %667 = vmatpush1.bf16.msra.mxu0 %v661
        %668 = vmatprep.subr.bf16.mxu0 0
        %669 = vmatpush1.bf16.msra.mxu0 0
        %670 = vmatprep.subr.bf16.mxu0 0
        %671 = vmatpush1.bf16.msra.mxu0 0
        %672 = vmatprep.subr.bf16.mxu0 0
        %673 = vmatpush1.bf16.msra.mxu0 0
        %674 = vmatprep.subr.bf16.mxu0 0
        %675 = vmatpush1.bf16.msra.mxu0 0
        %676 = vmatprep.subr.bf16.mxu0 0
        %677 = vmatpush1.bf16.msra.mxu0 0
        %678 = vmatprep.subr.bf16.mxu0 0
        %679 = vmatpush1.bf16.msra.mxu0 0
        %680 = vmatprep.subr.bf16.mxu0 0
        %681 = vmatpush1.bf16.msra.mxu0 0
        %682 = vmatprep.subr.bf16.mxu0 0
        %683 = vmatpush1.bf16.msra.mxu0 0
        %684 = vmatprep.subr.bf16.mxu0 0
        %685 = vmatpush1.bf16.msra.mxu0 0
        %686 = vmatprep.subr.bf16.mxu0 0
        %687 = vmatpush1.bf16.msra.mxu0 0
        %688 = vmatprep.subr.bf16.mxu0 0
        %689 = vmatpush1.bf16.msra.mxu0 0
        %690 = vmatprep.subr.bf16.mxu0 0
        %691 = vmatpush1.bf16.msra.mxu0 0
        %692 = vmatprep.subr.bf16.mxu0 0
        %693 = vmatpush1.bf16.msra.mxu0 0
        %694 = vmatprep.subr.bf16.mxu0 0
        %695 = vmatpush1.bf16.msra.mxu0 0
        %696 = vmatprep.mubr.bf16.mxu0 0
        %697 = vmatmul.mubr.bf16.gmra.mrb[0].mxu0 %v610
        %v698 = vpop.f32.mrb[0].mxu0
        %v699 = vadd.f32 0.0, %v698
        %v700 = vpop.f32.mrb[0].mxu0
        %v701 = vpop.f32.mrb[0].mxu0
        %v702 = vpop.f32.mrb[0].mxu0
        %703 = vdwg.mxu0
        %v708 = vunpack.c.l.b16 %v589
        %v709 = vunpack.c.l.b16 %v590
        %v710 = vunpack.c.l.b16 %v591
        %v711 = vunpack.c.l.b16 %v592
        %v712 = vpack.c.b16 %v709, %v708
        %v713 = vpack.c.b16 %v711, %v710
        %716 = vmatprep.subr.bf16.mxu0 0
        %717 = vmatpush1.bf16.msra.mxu0 %v712
        %718 = vmatprep.subr.bf16.mxu0 0
        %719 = vmatpush1.bf16.msra.mxu0 %v713
        %720 = vmatprep.subr.bf16.mxu0 0
        %721 = vmatpush1.bf16.msra.mxu0 0
        %722 = vmatprep.subr.bf16.mxu0 0
        %723 = vmatpush1.bf16.msra.mxu0 0
        %724 = vmatprep.subr.bf16.mxu0 0
        %725 = vmatpush1.bf16.msra.mxu0 0
        %726 = vmatprep.subr.bf16.mxu0 0
        %727 = vmatpush1.bf16.msra.mxu0 0
        %728 = vmatprep.subr.bf16.mxu0 0
        %729 = vmatpush1.bf16.msra.mxu0 0
        %730 = vmatprep.subr.bf16.mxu0 0
        %731 = vmatpush1.bf16.msra.mxu0 0
        %732 = vmatprep.subr.bf16.mxu0 0
        %733 = vmatpush1.bf16.msra.mxu0 0
        %734 = vmatprep.subr.bf16.mxu0 0
        %735 = vmatpush1.bf16.msra.mxu0 0
        %736 = vmatprep.subr.bf16.mxu0 0
        %737 = vmatpush1.bf16.msra.mxu0 0
        %738 = vmatprep.subr.bf16.mxu0 0
        %739 = vmatpush1.bf16.msra.mxu0 0
        %740 = vmatprep.subr.bf16.mxu0 0
        %741 = vmatpush1.bf16.msra.mxu0 0
        %742 = vmatprep.subr.bf16.mxu0 0
        %743 = vmatpush1.bf16.msra.mxu0 0
        %744 = vmatprep.subr.bf16.mxu0 0
        %745 = vmatpush1.bf16.msra.mxu0 0
        %746 = vmatprep.subr.bf16.mxu0 0
        %747 = vmatpush1.bf16.msra.mxu0 0
        %748 = vmatprep.mubr.bf16.mxu0 0
        %749 = vmatmul.mubr.bf16.gmra.mrb[0].mxu0 %v610
        %v750 = vpop.f32.mrb[0].mxu0
        %v751 = vadd.f32 0.0, %v750
        %v752 = vpop.f32.mrb[0].mxu0
        %v753 = vpop.f32.mrb[0].mxu0
        %v754 = vpop.f32.mrb[0].mxu0
        %755 = vdwg.mxu0
        %v760 = vunpack.c.l.b16 %v593
        %v761 = vunpack.c.l.b16 %v594
        %v762 = vunpack.c.l.b16 %v595
        %v763 = vunpack.c.l.b16 %v596
        %v764 = vpack.c.b16 %v761, %v760
        %v765 = vpack.c.b16 %v763, %v762
        %768 = vmatprep.subr.bf16.mxu0 0
        %769 = vmatpush1.bf16.msra.mxu0 %v764
        %770 = vmatprep.subr.bf16.mxu0 0
        %771 = vmatpush1.bf16.msra.mxu0 %v765
        %772 = vmatprep.subr.bf16.mxu0 0
        %773 = vmatpush1.bf16.msra.mxu0 0
        %774 = vmatprep.subr.bf16.mxu0 0
        %775 = vmatpush1.bf16.msra.mxu0 0
        %776 = vmatprep.subr.bf16.mxu0 0
        %777 = vmatpush1.bf16.msra.mxu0 0
        %778 = vmatprep.subr.bf16.mxu0 0
        %779 = vmatpush1.bf16.msra.mxu0 0
        %780 = vmatprep.subr.bf16.mxu0 0
        %781 = vmatpush1.bf16.msra.mxu0 0
        %782 = vmatprep.subr.bf16.mxu0 0
        %783 = vmatpush1.bf16.msra.mxu0 0
        %784 = vmatprep.subr.bf16.mxu0 0
        %785 = vmatpush1.bf16.msra.mxu0 0
        %786 = vmatprep.subr.bf16.mxu0 0
        %787 = vmatpush1.bf16.msra.mxu0 0
        %788 = vmatprep.subr.bf16.mxu0 0
        %789 = vmatpush1.bf16.msra.mxu0 0
        %790 = vmatprep.subr.bf16.mxu0 0
        %791 = vmatpush1.bf16.msra.mxu0 0
        %792 = vmatprep.subr.bf16.mxu0 0
        %793 = vmatpush1.bf16.msra.mxu0 0
        %794 = vmatprep.subr.bf16.mxu0 0
        %795 = vmatpush1.bf16.msra.mxu0 0
        %796 = vmatprep.subr.bf16.mxu0 0
        %797 = vmatpush1.bf16.msra.mxu0 0
        %798 = vmatprep.subr.bf16.mxu0 0
        %799 = vmatpush1.bf16.msra.mxu0 0
        %800 = vmatprep.mubr.bf16.mxu0 0
        %801 = vmatmul.mubr.bf16.gmra.mrb[0].mxu0 %v610
        %v802 = vpop.f32.mrb[0].mxu0
        %v803 = vadd.f32 0.0, %v802
        %v804 = vpop.f32.mrb[0].mxu0
        %v805 = vpop.f32.mrb[0].mxu0
        %v806 = vpop.f32.mrb[0].mxu0
        %807 = vdwg.mxu0
        %v808 = vld [vmem:[%s5] sm:$0xf]
        %v809 = vld [vmem:[%s5 + $0x4] sm:$0xf]
        %v810 = vld [vmem:[%s5 + $0x8] sm:$0xf]
        %v811 = vld [vmem:[%s5 + $0xc] sm:$0xf]
        %v812 = vld [vmem:[%s5 + $0x10] sm:$0xf]
        %v813 = vld [vmem:[%s5 + $0x14] sm:$0xf]
        %v814 = vld [vmem:[%s5 + $0x18] sm:$0xf]
        %v815 = vld [vmem:[%s5 + $0x1c] sm:$0xf]
        %v816 = vld [vmem:[%s5 + $0x20] sm:$0xf]
        %v817 = vld [vmem:[%s5 + $0x24] sm:$0xf]
        %v818 = vld [vmem:[%s5 + $0x28] sm:$0xf]
        %v819 = vld [vmem:[%s5 + $0x2c] sm:$0xf]
        %v820 = vld [vmem:[%s5 + $0x30] sm:$0xf]
        %v821 = vld [vmem:[%s5 + $0x34] sm:$0xf]
        %v822 = vld [vmem:[%s5 + $0x38] sm:$0xf]
        %v823 = vld [vmem:[%s5 + $0x3c] sm:$0xf]
        %v828 = vunpack.c.l.b16 %v808
        %v829 = vunpack.c.l.b16 %v809
        %v830 = vunpack.c.l.b16 %v810
        %v831 = vunpack.c.l.b16 %v811
        %v832 = vpack.c.b16 %v829, %v828
        %v833 = vpack.c.b16 %v831, %v830
        %v837 = vsel %vm381, %v352, 0
        %839 = vmatprep.subr.bf16.mxu0 0
        %840 = vmatpush1.bf16.msra.mxu0 %v832
        %841 = vmatprep.subr.bf16.mxu0 0
        %842 = vmatpush1.bf16.msra.mxu0 %v833
        %843 = vmatprep.subr.bf16.mxu0 0
        %844 = vmatpush1.bf16.msra.mxu0 0
        %845 = vmatprep.subr.bf16.mxu0 0
        %846 = vmatpush1.bf16.msra.mxu0 0
        %847 = vmatprep.subr.bf16.mxu0 0
        %848 = vmatpush1.bf16.msra.mxu0 0
        %849 = vmatprep.subr.bf16.mxu0 0
        %850 = vmatpush1.bf16.msra.mxu0 0
        %851 = vmatprep.subr.bf16.mxu0 0
        %852 = vmatpush1.bf16.msra.mxu0 0
        %853 = vmatprep.subr.bf16.mxu0 0
        %854 = vmatpush1.bf16.msra.mxu0 0
        %855 = vmatprep.subr.bf16.mxu0 0
        %856 = vmatpush1.bf16.msra.mxu0 0
        %857 = vmatprep.subr.bf16.mxu0 0
        %858 = vmatpush1.bf16.msra.mxu0 0
        %859 = vmatprep.subr.bf16.mxu0 0
        %860 = vmatpush1.bf16.msra.mxu0 0
        %861 = vmatprep.subr.bf16.mxu0 0
        %862 = vmatpush1.bf16.msra.mxu0 0
        %863 = vmatprep.subr.bf16.mxu0 0
        %864 = vmatpush1.bf16.msra.mxu0 0
        %865 = vmatprep.subr.bf16.mxu0 0
        %866 = vmatpush1.bf16.msra.mxu0 0
        %867 = vmatprep.subr.bf16.mxu0 0
        %868 = vmatpush1.bf16.msra.mxu0 0
        %869 = vmatprep.subr.bf16.mxu0 0
        %870 = vmatpush1.bf16.msra.mxu0 0
        %871 = vmatprep.mubr.bf16.mxu0 0
        %872 = vmatmul.mubr.bf16.gmra.mrb[0].mxu0 %v837
        %v873 = vpop.f32.mrb[0].mxu0
        %v874 = vadd.f32 0.0, %v873
        %v875 = vpop.f32.mrb[0].mxu0
        %v876 = vpop.f32.mrb[0].mxu0
        %v877 = vpop.f32.mrb[0].mxu0
        %878 = vdwg.mxu0
        %v883 = vunpack.c.l.b16 %v812
        %v884 = vunpack.c.l.b16 %v813
        %v885 = vunpack.c.l.b16 %v814
        %v886 = vunpack.c.l.b16 %v815
        %v887 = vpack.c.b16 %v884, %v883
        %v888 = vpack.c.b16 %v886, %v885
        %891 = vmatprep.subr.bf16.mxu0 0
        %892 = vmatpush1.bf16.msra.mxu0 %v887
        %893 = vmatprep.subr.bf16.mxu0 0
        %894 = vmatpush1.bf16.msra.mxu0 %v888
        %895 = vmatprep.subr.bf16.mxu0 0
        %896 = vmatpush1.bf16.msra.mxu0 0
        %897 = vmatprep.subr.bf16.mxu0 0
        %898 = vmatpush1.bf16.msra.mxu0 0
        %899 = vmatprep.subr.bf16.mxu0 0
        %900 = vmatpush1.bf16.msra.mxu0 0
        %901 = vmatprep.subr.bf16.mxu0 0
        %902 = vmatpush1.bf16.msra.mxu0 0
        %903 = vmatprep.subr.bf16.mxu0 0
        %904 = vmatpush1.bf16.msra.mxu0 0
        %905 = vmatprep.subr.bf16.mxu0 0
        %906 = vmatpush1.bf16.msra.mxu0 0
        %907 = vmatprep.subr.bf16.mxu0 0
        %908 = vmatpush1.bf16.msra.mxu0 0
        %909 = vmatprep.subr.bf16.mxu0 0
        %910 = vmatpush1.bf16.msra.mxu0 0
        %911 = vmatprep.subr.bf16.mxu0 0
        %912 = vmatpush1.bf16.msra.mxu0 0
        %913 = vmatprep.subr.bf16.mxu0 0
        %914 = vmatpush1.bf16.msra.mxu0 0
        %915 = vmatprep.subr.bf16.mxu0 0
        %916 = vmatpush1.bf16.msra.mxu0 0
        %917 = vmatprep.subr.bf16.mxu0 0
        %918 = vmatpush1.bf16.msra.mxu0 0
        %919 = vmatprep.subr.bf16.mxu0 0
        %920 = vmatpush1.bf16.msra.mxu0 0
        %921 = vmatprep.subr.bf16.mxu0 0
        %922 = vmatpush1.bf16.msra.mxu0 0
        %923 = vmatprep.mubr.bf16.mxu0 0
        %924 = vmatmul.mubr.bf16.gmra.mrb[0].mxu0 %v837
        %v925 = vpop.f32.mrb[0].mxu0
        %v926 = vadd.f32 0.0, %v925
        %v927 = vpop.f32.mrb[0].mxu0
        %v928 = vpop.f32.mrb[0].mxu0
        %v929 = vpop.f32.mrb[0].mxu0
        %930 = vdwg.mxu0
        %v935 = vunpack.c.l.b16 %v816
        %v936 = vunpack.c.l.b16 %v817
        %v937 = vunpack.c.l.b16 %v818
        %v938 = vunpack.c.l.b16 %v819
        %v939 = vpack.c.b16 %v936, %v935
        %v940 = vpack.c.b16 %v938, %v937
        %943 = vmatprep.subr.bf16.mxu0 0
        %944 = vmatpush1.bf16.msra.mxu0 %v939
        %945 = vmatprep.subr.bf16.mxu0 0
        %946 = vmatpush1.bf16.msra.mxu0 %v940
        %947 = vmatprep.subr.bf16.mxu0 0
        %948 = vmatpush1.bf16.msra.mxu0 0
        %949 = vmatprep.subr.bf16.mxu0 0
        %950 = vmatpush1.bf16.msra.mxu0 0
        %951 = vmatprep.subr.bf16.mxu0 0
        %952 = vmatpush1.bf16.msra.mxu0 0
        %953 = vmatprep.subr.bf16.mxu0 0
        %954 = vmatpush1.bf16.msra.mxu0 0
        %955 = vmatprep.subr.bf16.mxu0 0
        %956 = vmatpush1.bf16.msra.mxu0 0
        %957 = vmatprep.subr.bf16.mxu0 0
        %958 = vmatpush1.bf16.msra.mxu0 0
        %959 = vmatprep.subr.bf16.mxu0 0
        %960 = vmatpush1.bf16.msra.mxu0 0
        %961 = vmatprep.subr.bf16.mxu0 0
        %962 = vmatpush1.bf16.msra.mxu0 0
        %963 = vmatprep.subr.bf16.mxu0 0
        %964 = vmatpush1.bf16.msra.mxu0 0
        %965 = vmatprep.subr.bf16.mxu0 0
        %966 = vmatpush1.bf16.msra.mxu0 0
        %967 = vmatprep.subr.bf16.mxu0 0
        %968 = vmatpush1.bf16.msra.mxu0 0
        %969 = vmatprep.subr.bf16.mxu0 0
        %970 = vmatpush1.bf16.msra.mxu0 0
        %971 = vmatprep.subr.bf16.mxu0 0
        %972 = vmatpush1.bf16.msra.mxu0 0
        %973 = vmatprep.subr.bf16.mxu0 0
        %974 = vmatpush1.bf16.msra.mxu0 0
        %975 = vmatprep.mubr.bf16.mxu0 0
        %976 = vmatmul.mubr.bf16.gmra.mrb[0].mxu0 %v837
        %v977 = vpop.f32.mrb[0].mxu0
        %v978 = vadd.f32 0.0, %v977
        %v979 = vpop.f32.mrb[0].mxu0
        %v980 = vpop.f32.mrb[0].mxu0
        %v981 = vpop.f32.mrb[0].mxu0
        %982 = vdwg.mxu0
        %v987 = vunpack.c.l.b16 %v820
        %v988 = vunpack.c.l.b16 %v821
        %v989 = vunpack.c.l.b16 %v822
        %v990 = vunpack.c.l.b16 %v823
        %v991 = vpack.c.b16 %v988, %v987
        %v992 = vpack.c.b16 %v990, %v989
        %995 = vmatprep.subr.bf16.mxu0 0
        %996 = vmatpush1.bf16.msra.mxu0 %v991
        %997 = vmatprep.subr.bf16.mxu0 0
        %998 = vmatpush1.bf16.msra.mxu0 %v992
        %999 = vmatprep.subr.bf16.mxu0 0
        %1000 = vmatpush1.bf16.msra.mxu0 0
        %1001 = vmatprep.subr.bf16.mxu0 0
        %1002 = vmatpush1.bf16.msra.mxu0 0
        %1003 = vmatprep.subr.bf16.mxu0 0
        %1004 = vmatpush1.bf16.msra.mxu0 0
        %1005 = vmatprep.subr.bf16.mxu0 0
        %1006 = vmatpush1.bf16.msra.mxu0 0
        %1007 = vmatprep.subr.bf16.mxu0 0
        %1008 = vmatpush1.bf16.msra.mxu0 0
        %1009 = vmatprep.subr.bf16.mxu0 0
        %1010 = vmatpush1.bf16.msra.mxu0 0
        %1011 = vmatprep.subr.bf16.mxu0 0
        %1012 = vmatpush1.bf16.msra.mxu0 0
        %1013 = vmatprep.subr.bf16.mxu0 0
        %1014 = vmatpush1.bf16.msra.mxu0 0
        %1015 = vmatprep.subr.bf16.mxu0 0
        %1016 = vmatpush1.bf16.msra.mxu0 0
        %1017 = vmatprep.subr.bf16.mxu0 0
        %1018 = vmatpush1.bf16.msra.mxu0 0
        %1019 = vmatprep.subr.bf16.mxu0 0
        %1020 = vmatpush1.bf16.msra.mxu0 0
        %1021 = vmatprep.subr.bf16.mxu0 0
        %1022 = vmatpush1.bf16.msra.mxu0 0
        %1023 = vmatprep.subr.bf16.mxu0 0
        %1024 = vmatpush1.bf16.msra.mxu0 0
        %1025 = vmatprep.subr.bf16.mxu0 0
        %1026 = vmatpush1.bf16.msra.mxu0 0
        %1027 = vmatprep.mubr.bf16.mxu0 0
        %1028 = vmatmul.mubr.bf16.gmra.mrb[0].mxu0 %v837
        %v1029 = vpop.f32.mrb[0].mxu0
        %v1030 = vadd.f32 0.0, %v1029
        %v1031 = vpop.f32.mrb[0].mxu0
        %v1032 = vpop.f32.mrb[0].mxu0
        %v1033 = vpop.f32.mrb[0].mxu0
        %1034 = vdwg.mxu0
        %v1035 = vmul.f32 %v420, 0.35355338
        %v1036 = vmul.f32 %v472, 0.35355338
        %v1037 = vmul.f32 %v524, 0.35355338
        %v1038 = vmul.f32 %v576, 0.35355338
        %v1039 = vpack.c.bf16 %v1035, %v1035
        %v1040 = vpack.c.bf16 %v1036, %v1036
        %v1041 = vpack.c.bf16 %v1037, %v1037
        %v1042 = vpack.c.bf16 %v1038, %v1038
        %v1043 = vpack.c.bf16 %v647, %v647
        %v1044 = vpack.c.bf16 %v699, %v699
        %v1045 = vpack.c.bf16 %v751, %v751
        %v1046 = vpack.c.bf16 %v803, %v803
        %v1047 = vpack.c.bf16 %v874, %v874
        %v1048 = vpack.c.bf16 %v926, %v926
        %v1049 = vpack.c.bf16 %v978, %v978
        %v1050 = vpack.c.bf16 %v1030, %v1030
        %vm1051 = vcmask 64512
        %v1053 = vsel %vm1051, %v1039, 0
        %v1056 = vsel %vm1051, %v1043, 0
        %1058 = vmatprep.subr.bf16.mxu0 0
        %1059 = vmatpush1.bf16.xpose.msra.mxu0 %v1056
        %1060 = vmatprep.subr.bf16.mxu0 0
        %1061 = vmatpush1.bf16.xpose.msra.mxu0 0
        %1062 = vmatprep.subr.bf16.mxu0 0
        %1063 = vmatpush1.bf16.xpose.msra.mxu0 0
        %1064 = vmatprep.subr.bf16.mxu0 0
        %1065 = vmatpush1.bf16.xpose.msra.mxu0 0
        %1066 = vmatprep.subr.bf16.mxu0 0
        %1067 = vmatpush1.bf16.xpose.msra.mxu0 0
        %1068 = vmatprep.subr.bf16.mxu0 0
        %1069 = vmatpush1.bf16.xpose.msra.mxu0 0
        %1070 = vmatprep.subr.bf16.mxu0 0
        %1071 = vmatpush1.bf16.xpose.msra.mxu0 0
        %1072 = vmatprep.subr.bf16.mxu0 0
        %1073 = vmatpush1.bf16.xpose.msra.mxu0 0
        %1074 = vmatprep.subr.bf16.mxu0 0
        %1075 = vmatpush1.bf16.xpose.msra.mxu0 0
        %1076 = vmatprep.subr.bf16.mxu0 0
        %1077 = vmatpush1.bf16.xpose.msra.mxu0 0
        %1078 = vmatprep.subr.bf16.mxu0 0
        %1079 = vmatpush1.bf16.xpose.msra.mxu0 0
        %1080 = vmatprep.subr.bf16.mxu0 0
        %1081 = vmatpush1.bf16.xpose.msra.mxu0 0
        %1082 = vmatprep.subr.bf16.mxu0 0
        %1083 = vmatpush1.bf16.xpose.msra.mxu0 0
        %1084 = vmatprep.subr.bf16.mxu0 0
        %1085 = vmatpush1.bf16.xpose.msra.mxu0 0
        %1086 = vmatprep.subr.bf16.mxu0 0
        %1087 = vmatpush1.bf16.xpose.msra.mxu0 0
        %1088 = vmatprep.subr.bf16.mxu0 0
        %1089 = vmatpush1.bf16.xpose.msra.mxu0 0
        %1090 = vmatprep.mubr.bf16.mxu0 0
        %1091 = vmatmul.mubr.bf16.gmra.mrb[0].mxu0 %v1053
        %v1092 = vpop.f32.mrb[0].mxu0
        %v1093 = vadd.f32 0.0, %v1092
        %v1094 = vpop.f32.mrb[0].mxu0
        %v1095 = vpop.f32.mrb[0].mxu0
        %v1096 = vpop.f32.mrb[0].mxu0
        %1097 = vdwg.mxu0
        %v1099 = vsel %vm1051, %v1040, 0
        %v1102 = vsel %vm1051, %v1044, 0
        %1104 = vmatprep.subr.bf16.mxu0 0
        %1105 = vmatpush1.bf16.xpose.msra.mxu0 %v1102
        %1106 = vmatprep.subr.bf16.mxu0 0
        %1107 = vmatpush1.bf16.xpose.msra.mxu0 0
        %1108 = vmatprep.subr.bf16.mxu0 0
        %1109 = vmatpush1.bf16.xpose.msra.mxu0 0
        %1110 = vmatprep.subr.bf16.mxu0 0
        %1111 = vmatpush1.bf16.xpose.msra.mxu0 0
        %1112 = vmatprep.subr.bf16.mxu0 0
        %1113 = vmatpush1.bf16.xpose.msra.mxu0 0
        %1114 = vmatprep.subr.bf16.mxu0 0
        %1115 = vmatpush1.bf16.xpose.msra.mxu0 0
        %1116 = vmatprep.subr.bf16.mxu0 0
        %1117 = vmatpush1.bf16.xpose.msra.mxu0 0
        %1118 = vmatprep.subr.bf16.mxu0 0
        %1119 = vmatpush1.bf16.xpose.msra.mxu0 0
        %1120 = vmatprep.subr.bf16.mxu0 0
        %1121 = vmatpush1.bf16.xpose.msra.mxu0 0
        %1122 = vmatprep.subr.bf16.mxu0 0
        %1123 = vmatpush1.bf16.xpose.msra.mxu0 0
        %1124 = vmatprep.subr.bf16.mxu0 0
        %1125 = vmatpush1.bf16.xpose.msra.mxu0 0
        %1126 = vmatprep.subr.bf16.mxu0 0
        %1127 = vmatpush1.bf16.xpose.msra.mxu0 0
        %1128 = vmatprep.subr.bf16.mxu0 0
        %1129 = vmatpush1.bf16.xpose.msra.mxu0 0
        %1130 = vmatprep.subr.bf16.mxu0 0
        %1131 = vmatpush1.bf16.xpose.msra.mxu0 0
        %1132 = vmatprep.subr.bf16.mxu0 0
        %1133 = vmatpush1.bf16.xpose.msra.mxu0 0
        %1134 = vmatprep.subr.bf16.mxu0 0
        %1135 = vmatpush1.bf16.xpose.msra.mxu0 0
        %1136 = vmatprep.mubr.bf16.mxu0 0
        %1137 = vmatmul.mubr.bf16.gmra.mrb[0].mxu0 %v1099
        %v1138 = vpop.f32.mrb[0].mxu0
        %v1139 = vadd.f32 0.0, %v1138
        %v1140 = vpop.f32.mrb[0].mxu0
        %v1141 = vpop.f32.mrb[0].mxu0
        %v1142 = vpop.f32.mrb[0].mxu0
        %1143 = vdwg.mxu0
        %v1145 = vsel %vm1051, %v1041, 0
        %v1148 = vsel %vm1051, %v1045, 0
        %1150 = vmatprep.subr.bf16.mxu0 0
        %1151 = vmatpush1.bf16.xpose.msra.mxu0 %v1148
        %1152 = vmatprep.subr.bf16.mxu0 0
        %1153 = vmatpush1.bf16.xpose.msra.mxu0 0
        %1154 = vmatprep.subr.bf16.mxu0 0
        %1155 = vmatpush1.bf16.xpose.msra.mxu0 0
        %1156 = vmatprep.subr.bf16.mxu0 0
        %1157 = vmatpush1.bf16.xpose.msra.mxu0 0
        %1158 = vmatprep.subr.bf16.mxu0 0
        %1159 = vmatpush1.bf16.xpose.msra.mxu0 0
        %1160 = vmatprep.subr.bf16.mxu0 0
        %1161 = vmatpush1.bf16.xpose.msra.mxu0 0
        %1162 = vmatprep.subr.bf16.mxu0 0
        %1163 = vmatpush1.bf16.xpose.msra.mxu0 0
        %1164 = vmatprep.subr.bf16.mxu0 0
        %1165 = vmatpush1.bf16.xpose.msra.mxu0 0
        %1166 = vmatprep.subr.bf16.mxu0 0
        %1167 = vmatpush1.bf16.xpose.msra.mxu0 0
        %1168 = vmatprep.subr.bf16.mxu0 0
        %1169 = vmatpush1.bf16.xpose.msra.mxu0 0
        %1170 = vmatprep.subr.bf16.mxu0 0
        %1171 = vmatpush1.bf16.xpose.msra.mxu0 0
        %1172 = vmatprep.subr.bf16.mxu0 0
        %1173 = vmatpush1.bf16.xpose.msra.mxu0 0
        %1174 = vmatprep.subr.bf16.mxu0 0
        %1175 = vmatpush1.bf16.xpose.msra.mxu0 0
        %1176 = vmatprep.subr.bf16.mxu0 0
        %1177 = vmatpush1.bf16.xpose.msra.mxu0 0
        %1178 = vmatprep.subr.bf16.mxu0 0
        %1179 = vmatpush1.bf16.xpose.msra.mxu0 0
        %1180 = vmatprep.subr.bf16.mxu0 0
        %1181 = vmatpush1.bf16.xpose.msra.mxu0 0
        %1182 = vmatprep.mubr.bf16.mxu0 0
        %1183 = vmatmul.mubr.bf16.gmra.mrb[0].mxu0 %v1145
        %v1184 = vpop.f32.mrb[0].mxu0
        %v1185 = vadd.f32 0.0, %v1184
        %v1186 = vpop.f32.mrb[0].mxu0
        %v1187 = vpop.f32.mrb[0].mxu0
        %v1188 = vpop.f32.mrb[0].mxu0
        %1189 = vdwg.mxu0
        %v1191 = vsel %vm1051, %v1042, 0
        %v1194 = vsel %vm1051, %v1046, 0
        %1196 = vmatprep.subr.bf16.mxu0 0
        %1197 = vmatpush1.bf16.xpose.msra.mxu0 %v1194
        %1198 = vmatprep.subr.bf16.mxu0 0
        %1199 = vmatpush1.bf16.xpose.msra.mxu0 0
        %1200 = vmatprep.subr.bf16.mxu0 0
        %1201 = vmatpush1.bf16.xpose.msra.mxu0 0
        %1202 = vmatprep.subr.bf16.mxu0 0
        %1203 = vmatpush1.bf16.xpose.msra.mxu0 0
        %1204 = vmatprep.subr.bf16.mxu0 0
        %1205 = vmatpush1.bf16.xpose.msra.mxu0 0
        %1206 = vmatprep.subr.bf16.mxu0 0
        %1207 = vmatpush1.bf16.xpose.msra.mxu0 0
        %1208 = vmatprep.subr.bf16.mxu0 0
        %1209 = vmatpush1.bf16.xpose.msra.mxu0 0
        %1210 = vmatprep.subr.bf16.mxu0 0
        %1211 = vmatpush1.bf16.xpose.msra.mxu0 0
        %1212 = vmatprep.subr.bf16.mxu0 0
        %1213 = vmatpush1.bf16.xpose.msra.mxu0 0
        %1214 = vmatprep.subr.bf16.mxu0 0
        %1215 = vmatpush1.bf16.xpose.msra.mxu0 0
        %1216 = vmatprep.subr.bf16.mxu0 0
        %1217 = vmatpush1.bf16.xpose.msra.mxu0 0
        %1218 = vmatprep.subr.bf16.mxu0 0
        %1219 = vmatpush1.bf16.xpose.msra.mxu0 0
        %1220 = vmatprep.subr.bf16.mxu0 0
        %1221 = vmatpush1.bf16.xpose.msra.mxu0 0
        %1222 = vmatprep.subr.bf16.mxu0 0
        %1223 = vmatpush1.bf16.xpose.msra.mxu0 0
        %1224 = vmatprep.subr.bf16.mxu0 0
        %1225 = vmatpush1.bf16.xpose.msra.mxu0 0
        %1226 = vmatprep.subr.bf16.mxu0 0
        %1227 = vmatpush1.bf16.xpose.msra.mxu0 0
        %1228 = vmatprep.mubr.bf16.mxu0 0
        %1229 = vmatmul.mubr.bf16.gmra.mrb[0].mxu0 %v1191
        %v1230 = vpop.f32.mrb[0].mxu0
        %v1231 = vadd.f32 0.0, %v1230
        %v1232 = vpop.f32.mrb[0].mxu0
        %v1233 = vpop.f32.mrb[0].mxu0
        %v1234 = vpop.f32.mrb[0].mxu0
        %1235 = vdwg.mxu0
        %v1236 = vsel %vm1051, %v1093, -inf
        %1237 = vmax.xlane.f32.xlu0 %v1236
        %v1238 = vpop.xlane.xlu0 %1237
        %v1239 = vsel %vm1051, %v1139, -inf
        %1240 = vmax.xlane.f32.xlu0 %v1239
        %v1241 = vpop.xlane.xlu0 %1240
        %v1242 = vsel %vm1051, %v1185, -inf
        %1243 = vmax.xlane.f32.xlu0 %v1242
        %v1244 = vpop.xlane.xlu0 %1243
        %v1245 = vsel %vm1051, %v1231, -inf
        %1246 = vmax.xlane.f32.xlu0 %v1245
        %v1247 = vpop.xlane.xlu0 %1246
        %v1248 = vsub.f32 %v1093, %v1238
        %v1249 = vsub.f32 %v1139, %v1241
        %v1250 = vsub.f32 %v1185, %v1244
        %v1251 = vsub.f32 %v1231, %v1247
        %v1252 = vmul.f32 %v1248, 1.442695
        %v1253 = vpow.pop %v1252
        %v1254 = vmul.f32 %v1249, 1.442695
        %v1255 = vpow.pop %v1254
        %v1256 = vmul.f32 %v1250, 1.442695
        %v1257 = vpow.pop %v1256
        %v1258 = vmul.f32 %v1251, 1.442695
        %v1259 = vpow.pop %v1258
        %v1260 = vsel %vm1051, %v1253, 0.0
        %1261 = vadd.xlane.f32.xlu0 %v1260
        %v1262 = vpop.xlane.xlu0 %1261
        %v1263 = vsel %vm1051, %v1255, 0.0
        %1264 = vadd.xlane.f32.xlu0 %v1263
        %v1265 = vpop.xlane.xlu0 %1264
        %v1266 = vsel %vm1051, %v1257, 0.0
        %1267 = vadd.xlane.f32.xlu0 %v1266
        %v1268 = vpop.xlane.xlu0 %1267
        %v1269 = vsel %vm1051, %v1259, 0.0
        %1270 = vadd.xlane.f32.xlu0 %v1269
        %v1271 = vpop.xlane.xlu0 %1270
        %v1272 = vrcp.pop %v1262
        %v1273 = vmul.f32 1.0, %v1272
        %v1274 = vrcp.pop %v1265
        %v1275 = vmul.f32 1.0, %v1274
        %v1276 = vrcp.pop %v1268
        %v1277 = vmul.f32 1.0, %v1276
        %v1278 = vrcp.pop %v1271
        %v1279 = vmul.f32 1.0, %v1278
        %v1280 = vmul.f32 %v1253, %v1273
        %v1281 = vmul.f32 %v1255, %v1275
        %v1282 = vmul.f32 %v1257, %v1277
        %v1283 = vmul.f32 %v1259, %v1279
        %1284 = vst.msk [vmem:[%s333] sm:$0xff] %vm1051, %v1280
        %1285 = vst.msk [vmem:[%s333 + $0x8] sm:$0xff] %vm1051, %v1281
        %1286 = vst.msk [vmem:[%s333 + $0x10] sm:$0xff] %vm1051, %v1282
        %1287 = vst.msk [vmem:[%s333 + $0x18] sm:$0xff] %vm1051, %v1283
        %v1288 = vpack.c.bf16 %v1280, %v1280
        %v1289 = vpack.c.bf16 %v1281, %v1281
        %v1290 = vpack.c.bf16 %v1282, %v1282
        %v1291 = vpack.c.bf16 %v1283, %v1283
        %v1293 = vsel %vm1051, %v1288, 0
        %vm1295 = vcmask 1043456
        %v1297 = vsel %vm1295, %v1047, 0
        %1299 = vmatprep.subr.bf16.mxu0 0
        %1300 = vmatpush1.bf16.msra.mxu0 %v1297
        %1301 = vmatprep.subr.bf16.mxu0 0
        %1302 = vmatpush1.bf16.msra.mxu0 0
        %1303 = vmatprep.subr.bf16.mxu0 0
        %1304 = vmatpush1.bf16.msra.mxu0 0
        %1305 = vmatprep.subr.bf16.mxu0 0
        %1306 = vmatpush1.bf16.msra.mxu0 0
        %1307 = vmatprep.subr.bf16.mxu0 0
        %1308 = vmatpush1.bf16.msra.mxu0 0
        %1309 = vmatprep.subr.bf16.mxu0 0
        %1310 = vmatpush1.bf16.msra.mxu0 0
        %1311 = vmatprep.subr.bf16.mxu0 0
        %1312 = vmatpush1.bf16.msra.mxu0 0
        %1313 = vmatprep.subr.bf16.mxu0 0
        %1314 = vmatpush1.bf16.msra.mxu0 0
        %1315 = vmatprep.subr.bf16.mxu0 0
        %1316 = vmatpush1.bf16.msra.mxu0 0
        %1317 = vmatprep.subr.bf16.mxu0 0
        %1318 = vmatpush1.bf16.msra.mxu0 0
        %1319 = vmatprep.subr.bf16.mxu0 0
        %1320 = vmatpush1.bf16.msra.mxu0 0
        %1321 = vmatprep.subr.bf16.mxu0 0
        %1322 = vmatpush1.bf16.msra.mxu0 0
        %1323 = vmatprep.subr.bf16.mxu0 0
        %1324 = vmatpush1.bf16.msra.mxu0 0
        %1325 = vmatprep.subr.bf16.mxu0 0
        %1326 = vmatpush1.bf16.msra.mxu0 0
        %1327 = vmatprep.subr.bf16.mxu0 0
        %1328 = vmatpush1.bf16.msra.mxu0 0
        %1329 = vmatprep.subr.bf16.mxu0 0
        %1330 = vmatpush1.bf16.msra.mxu0 0
        %1331 = vmatprep.mubr.bf16.mxu0 0
        %1332 = vmatmul.mubr.bf16.gmra.mrb[0].mxu0 %v1293
        %v1333 = vpop.f32.mrb[0].mxu0
        %v1334 = vadd.f32 0.0, %v1333
        %v1335 = vpop.f32.mrb[0].mxu0
        %v1336 = vpop.f32.mrb[0].mxu0
        %v1337 = vpop.f32.mrb[0].mxu0
        %1338 = vdwg.mxu0
        %v1340 = vsel %vm1051, %v1289, 0
        %v1343 = vsel %vm1295, %v1048, 0
        %1345 = vmatprep.subr.bf16.mxu0 0
        %1346 = vmatpush1.bf16.msra.mxu0 %v1343
        %1347 = vmatprep.subr.bf16.mxu0 0
        %1348 = vmatpush1.bf16.msra.mxu0 0
        %1349 = vmatprep.subr.bf16.mxu0 0
        %1350 = vmatpush1.bf16.msra.mxu0 0
        %1351 = vmatprep.subr.bf16.mxu0 0
        %1352 = vmatpush1.bf16.msra.mxu0 0
        %1353 = vmatprep.subr.bf16.mxu0 0
        %1354 = vmatpush1.bf16.msra.mxu0 0
        %1355 = vmatprep.subr.bf16.mxu0 0
        %1356 = vmatpush1.bf16.msra.mxu0 0
        %1357 = vmatprep.subr.bf16.mxu0 0
        %1358 = vmatpush1.bf16.msra.mxu0 0
        %1359 = vmatprep.subr.bf16.mxu0 0
        %1360 = vmatpush1.bf16.msra.mxu0 0
        %1361 = vmatprep.subr.bf16.mxu0 0
        %1362 = vmatpush1.bf16.msra.mxu0 0
        %1363 = vmatprep.subr.bf16.mxu0 0
        %1364 = vmatpush1.bf16.msra.mxu0 0
        %1365 = vmatprep.subr.bf16.mxu0 0
        %1366 = vmatpush1.bf16.msra.mxu0 0
        %1367 = vmatprep.subr.bf16.mxu0 0
        %1368 = vmatpush1.bf16.msra.mxu0 0
        %1369 = vmatprep.subr.bf16.mxu0 0
        %1370 = vmatpush1.bf16.msra.mxu0 0
        %1371 = vmatprep.subr.bf16.mxu0 0
        %1372 = vmatpush1.bf16.msra.mxu0 0
        %1373 = vmatprep.subr.bf16.mxu0 0
        %1374 = vmatpush1.bf16.msra.mxu0 0
        %1375 = vmatprep.subr.bf16.mxu0 0
        %1376 = vmatpush1.bf16.msra.mxu0 0
        %1377 = vmatprep.mubr.bf16.mxu0 0
        %1378 = vmatmul.mubr.bf16.gmra.mrb[0].mxu0 %v1340
        %v1379 = vpop.f32.mrb[0].mxu0
        %v1380 = vadd.f32 0.0, %v1379
        %v1381 = vpop.f32.mrb[0].mxu0
        %v1382 = vpop.f32.mrb[0].mxu0
        %v1383 = vpop.f32.mrb[0].mxu0
        %1384 = vdwg.mxu0
        %v1386 = vsel %vm1051, %v1290, 0
        %v1389 = vsel %vm1295, %v1049, 0
        %1391 = vmatprep.subr.bf16.mxu0 0
        %1392 = vmatpush1.bf16.msra.mxu0 %v1389
        %1393 = vmatprep.subr.bf16.mxu0 0
        %1394 = vmatpush1.bf16.msra.mxu0 0
        %1395 = vmatprep.subr.bf16.mxu0 0
        %1396 = vmatpush1.bf16.msra.mxu0 0
        %1397 = vmatprep.subr.bf16.mxu0 0
        %1398 = vmatpush1.bf16.msra.mxu0 0
        %1399 = vmatprep.subr.bf16.mxu0 0
        %1400 = vmatpush1.bf16.msra.mxu0 0
        %1401 = vmatprep.subr.bf16.mxu0 0
        %1402 = vmatpush1.bf16.msra.mxu0 0
        %1403 = vmatprep.subr.bf16.mxu0 0
        %1404 = vmatpush1.bf16.msra.mxu0 0
        %1405 = vmatprep.subr.bf16.mxu0 0
        %1406 = vmatpush1.bf16.msra.mxu0 0
        %1407 = vmatprep.subr.bf16.mxu0 0
        %1408 = vmatpush1.bf16.msra.mxu0 0
        %1409 = vmatprep.subr.bf16.mxu0 0
        %1410 = vmatpush1.bf16.msra.mxu0 0
        %1411 = vmatprep.subr.bf16.mxu0 0
        %1412 = vmatpush1.bf16.msra.mxu0 0
        %1413 = vmatprep.subr.bf16.mxu0 0
        %1414 = vmatpush1.bf16.msra.mxu0 0
        %1415 = vmatprep.subr.bf16.mxu0 0
        %1416 = vmatpush1.bf16.msra.mxu0 0
        %1417 = vmatprep.subr.bf16.mxu0 0
        %1418 = vmatpush1.bf16.msra.mxu0 0
        %1419 = vmatprep.subr.bf16.mxu0 0
        %1420 = vmatpush1.bf16.msra.mxu0 0
        %1421 = vmatprep.subr.bf16.mxu0 0
        %1422 = vmatpush1.bf16.msra.mxu0 0
        %1423 = vmatprep.mubr.bf16.mxu0 0
        %1424 = vmatmul.mubr.bf16.gmra.mrb[0].mxu0 %v1386
        %v1425 = vpop.f32.mrb[0].mxu0
        %v1426 = vadd.f32 0.0, %v1425
        %v1427 = vpop.f32.mrb[0].mxu0
        %v1428 = vpop.f32.mrb[0].mxu0
        %v1429 = vpop.f32.mrb[0].mxu0
        %1430 = vdwg.mxu0
        %v1432 = vsel %vm1051, %v1291, 0
        %v1435 = vsel %vm1295, %v1050, 0
        %1437 = vmatprep.subr.bf16.mxu0 0
        %1438 = vmatpush1.bf16.msra.mxu0 %v1435
        %1439 = vmatprep.subr.bf16.mxu0 0
        %1440 = vmatpush1.bf16.msra.mxu0 0
        %1441 = vmatprep.subr.bf16.mxu0 0
        %1442 = vmatpush1.bf16.msra.mxu0 0
        %1443 = vmatprep.subr.bf16.mxu0 0
        %1444 = vmatpush1.bf16.msra.mxu0 0
        %1445 = vmatprep.subr.bf16.mxu0 0
        %1446 = vmatpush1.bf16.msra.mxu0 0
        %1447 = vmatprep.subr.bf16.mxu0 0
        %1448 = vmatpush1.bf16.msra.mxu0 0
        %1449 = vmatprep.subr.bf16.mxu0 0
        %1450 = vmatpush1.bf16.msra.mxu0 0
        %1451 = vmatprep.subr.bf16.mxu0 0
        %1452 = vmatpush1.bf16.msra.mxu0 0
        %1453 = vmatprep.subr.bf16.mxu0 0
        %1454 = vmatpush1.bf16.msra.mxu0 0
        %1455 = vmatprep.subr.bf16.mxu0 0
        %1456 = vmatpush1.bf16.msra.mxu0 0
        %1457 = vmatprep.subr.bf16.mxu0 0
        %1458 = vmatpush1.bf16.msra.mxu0 0
        %1459 = vmatprep.subr.bf16.mxu0 0
        %1460 = vmatpush1.bf16.msra.mxu0 0
        %1461 = vmatprep.subr.bf16.mxu0 0
        %1462 = vmatpush1.bf16.msra.mxu0 0
        %1463 = vmatprep.subr.bf16.mxu0 0
        %1464 = vmatpush1.bf16.msra.mxu0 0
        %1465 = vmatprep.subr.bf16.mxu0 0
        %1466 = vmatpush1.bf16.msra.mxu0 0
        %1467 = vmatprep.subr.bf16.mxu0 0
        %1468 = vmatpush1.bf16.msra.mxu0 0
        %1469 = vmatprep.mubr.bf16.mxu0 0
        %1470 = vmatmul.mubr.bf16.gmra.mrb[0].mxu0 %v1432
        %v1471 = vpop.f32.mrb[0].mxu0
        %v1472 = vadd.f32 0.0, %v1471
        %v1473 = vpop.f32.mrb[0].mxu0
        %v1474 = vpop.f32.mrb[0].mxu0
        %v1475 = vpop.f32.mrb[0].mxu0
        %1476 = vdwg.mxu0
        %v1477 = vpack.c.bf16 %v1334, %v1334
        %v1478 = vpack.c.bf16 %v1380, %v1380
        %v1479 = vpack.c.bf16 %v1426, %v1426
        %v1480 = vpack.c.bf16 %v1472, %v1472
        %v1481 = vld [vmem:[%s6] sm:$0xf]
        %v1482 = vld [vmem:[%s6 + $0x4] sm:$0xf]
        %v1483 = vld [vmem:[%s6 + $0x8] sm:$0xf]
        %v1484 = vld [vmem:[%s6 + $0xc] sm:$0xf]
        %v1486 = vsel %vm1051, %v1477, 0
        %v1489 = vsel %vm1295, %v1481, 0
        %1491 = vmatprep.subr.bf16.mxu0 0
        %1492 = vmatpush1.bf16.msra.mxu0 %v1489
        %1493 = vmatprep.subr.bf16.mxu0 0
        %1494 = vmatpush1.bf16.msra.mxu0 0
        %1495 = vmatprep.subr.bf16.mxu0 0
        %1496 = vmatpush1.bf16.msra.mxu0 0
        %1497 = vmatprep.subr.bf16.mxu0 0
        %1498 = vmatpush1.bf16.msra.mxu0 0
        %1499 = vmatprep.subr.bf16.mxu0 0
        %1500 = vmatpush1.bf16.msra.mxu0 0
        %1501 = vmatprep.subr.bf16.mxu0 0
        %1502 = vmatpush1.bf16.msra.mxu0 0
        %1503 = vmatprep.subr.bf16.mxu0 0
        %1504 = vmatpush1.bf16.msra.mxu0 0
        %1505 = vmatprep.subr.bf16.mxu0 0
        %1506 = vmatpush1.bf16.msra.mxu0 0
        %1507 = vmatprep.subr.bf16.mxu0 0
        %1508 = vmatpush1.bf16.msra.mxu0 0
        %1509 = vmatprep.subr.bf16.mxu0 0
        %1510 = vmatpush1.bf16.msra.mxu0 0
        %1511 = vmatprep.subr.bf16.mxu0 0
        %1512 = vmatpush1.bf16.msra.mxu0 0
        %1513 = vmatprep.subr.bf16.mxu0 0
        %1514 = vmatpush1.bf16.msra.mxu0 0
        %1515 = vmatprep.subr.bf16.mxu0 0
        %1516 = vmatpush1.bf16.msra.mxu0 0
        %1517 = vmatprep.subr.bf16.mxu0 0
        %1518 = vmatpush1.bf16.msra.mxu0 0
        %1519 = vmatprep.subr.bf16.mxu0 0
        %1520 = vmatpush1.bf16.msra.mxu0 0
        %1521 = vmatprep.subr.bf16.mxu0 0
        %1522 = vmatpush1.bf16.msra.mxu0 0
        %1523 = vmatprep.mubr.bf16.mxu0 0
        %1524 = vmatmul.mubr.bf16.gmra.mrb[0].mxu0 %v1486
        %v1525 = vpop.f32.mrb[0].mxu0
        %v1526 = vadd.f32 0.0, %v1525
        %v1527 = vpop.f32.mrb[0].mxu0
        %v1528 = vpop.f32.mrb[0].mxu0
        %v1529 = vpop.f32.mrb[0].mxu0
        %1530 = vdwg.mxu0
        %v1532 = vsel %vm1051, %v1478, 0
        %v1535 = vsel %vm1295, %v1482, 0
        %1537 = vmatprep.subr.bf16.mxu0 0
        %1538 = vmatpush1.bf16.msra.mxu0 %v1535
        %1539 = vmatprep.subr.bf16.mxu0 0
        %1540 = vmatpush1.bf16.msra.mxu0 0
        %1541 = vmatprep.subr.bf16.mxu0 0
        %1542 = vmatpush1.bf16.msra.mxu0 0
        %1543 = vmatprep.subr.bf16.mxu0 0
        %1544 = vmatpush1.bf16.msra.mxu0 0
        %1545 = vmatprep.subr.bf16.mxu0 0
        %1546 = vmatpush1.bf16.msra.mxu0 0
        %1547 = vmatprep.subr.bf16.mxu0 0
        %1548 = vmatpush1.bf16.msra.mxu0 0
        %1549 = vmatprep.subr.bf16.mxu0 0
        %1550 = vmatpush1.bf16.msra.mxu0 0
        %1551 = vmatprep.subr.bf16.mxu0 0
        %1552 = vmatpush1.bf16.msra.mxu0 0
        %1553 = vmatprep.subr.bf16.mxu0 0
        %1554 = vmatpush1.bf16.msra.mxu0 0
        %1555 = vmatprep.subr.bf16.mxu0 0
        %1556 = vmatpush1.bf16.msra.mxu0 0
        %1557 = vmatprep.subr.bf16.mxu0 0
        %1558 = vmatpush1.bf16.msra.mxu0 0
        %1559 = vmatprep.subr.bf16.mxu0 0
        %1560 = vmatpush1.bf16.msra.mxu0 0
        %1561 = vmatprep.subr.bf16.mxu0 0
        %1562 = vmatpush1.bf16.msra.mxu0 0
        %1563 = vmatprep.subr.bf16.mxu0 0
        %1564 = vmatpush1.bf16.msra.mxu0 0
        %1565 = vmatprep.subr.bf16.mxu0 0
        %1566 = vmatpush1.bf16.msra.mxu0 0
        %1567 = vmatprep.subr.bf16.mxu0 0
        %1568 = vmatpush1.bf16.msra.mxu0 0
        %1569 = vmatprep.mubr.bf16.mxu0 0
        %1570 = vmatmul.mubr.bf16.gmra.mrb[0].mxu0 %v1532
        %v1571 = vpop.f32.mrb[0].mxu0
        %v1572 = vadd.f32 0.0, %v1571
        %v1573 = vpop.f32.mrb[0].mxu0
        %v1574 = vpop.f32.mrb[0].mxu0
        %v1575 = vpop.f32.mrb[0].mxu0
        %1576 = vdwg.mxu0
        %v1578 = vsel %vm1051, %v1479, 0
        %v1581 = vsel %vm1295, %v1483, 0
        %1583 = vmatprep.subr.bf16.mxu0 0
        %1584 = vmatpush1.bf16.msra.mxu0 %v1581
        %1585 = vmatprep.subr.bf16.mxu0 0
        %1586 = vmatpush1.bf16.msra.mxu0 0
        %1587 = vmatprep.subr.bf16.mxu0 0
        %1588 = vmatpush1.bf16.msra.mxu0 0
        %1589 = vmatprep.subr.bf16.mxu0 0
        %1590 = vmatpush1.bf16.msra.mxu0 0
        %1591 = vmatprep.subr.bf16.mxu0 0
        %1592 = vmatpush1.bf16.msra.mxu0 0
        %1593 = vmatprep.subr.bf16.mxu0 0
        %1594 = vmatpush1.bf16.msra.mxu0 0
        %1595 = vmatprep.subr.bf16.mxu0 0
        %1596 = vmatpush1.bf16.msra.mxu0 0
        %1597 = vmatprep.subr.bf16.mxu0 0
        %1598 = vmatpush1.bf16.msra.mxu0 0
        %1599 = vmatprep.subr.bf16.mxu0 0
        %1600 = vmatpush1.bf16.msra.mxu0 0
        %1601 = vmatprep.subr.bf16.mxu0 0
        %1602 = vmatpush1.bf16.msra.mxu0 0
        %1603 = vmatprep.subr.bf16.mxu0 0
        %1604 = vmatpush1.bf16.msra.mxu0 0
        %1605 = vmatprep.subr.bf16.mxu0 0
        %1606 = vmatpush1.bf16.msra.mxu0 0
        %1607 = vmatprep.subr.bf16.mxu0 0
        %1608 = vmatpush1.bf16.msra.mxu0 0
        %1609 = vmatprep.subr.bf16.mxu0 0
        %1610 = vmatpush1.bf16.msra.mxu0 0
        %1611 = vmatprep.subr.bf16.mxu0 0
        %1612 = vmatpush1.bf16.msra.mxu0 0
        %1613 = vmatprep.subr.bf16.mxu0 0
        %1614 = vmatpush1.bf16.msra.mxu0 0
        %1615 = vmatprep.mubr.bf16.mxu0 0
        %1616 = vmatmul.mubr.bf16.gmra.mrb[0].mxu0 %v1578
        %v1617 = vpop.f32.mrb[0].mxu0
        %v1618 = vadd.f32 0.0, %v1617
        %v1619 = vpop.f32.mrb[0].mxu0
        %v1620 = vpop.f32.mrb[0].mxu0
        %v1621 = vpop.f32.mrb[0].mxu0
        %1622 = vdwg.mxu0
        %v1624 = vsel %vm1051, %v1480, 0
        %v1627 = vsel %vm1295, %v1484, 0
        %1629 = vmatprep.subr.bf16.mxu0 0
        %1630 = vmatpush1.bf16.msra.mxu0 %v1627
        %1631 = vmatprep.subr.bf16.mxu0 0
        %1632 = vmatpush1.bf16.msra.mxu0 0
        %1633 = vmatprep.subr.bf16.mxu0 0
        %1634 = vmatpush1.bf16.msra.mxu0 0
        %1635 = vmatprep.subr.bf16.mxu0 0
        %1636 = vmatpush1.bf16.msra.mxu0 0
        %1637 = vmatprep.subr.bf16.mxu0 0
        %1638 = vmatpush1.bf16.msra.mxu0 0
        %1639 = vmatprep.subr.bf16.mxu0 0
        %1640 = vmatpush1.bf16.msra.mxu0 0
        %1641 = vmatprep.subr.bf16.mxu0 0
        %1642 = vmatpush1.bf16.msra.mxu0 0
        %1643 = vmatprep.subr.bf16.mxu0 0
        %1644 = vmatpush1.bf16.msra.mxu0 0
        %1645 = vmatprep.subr.bf16.mxu0 0
        %1646 = vmatpush1.bf16.msra.mxu0 0
        %1647 = vmatprep.subr.bf16.mxu0 0
        %1648 = vmatpush1.bf16.msra.mxu0 0
        %1649 = vmatprep.subr.bf16.mxu0 0
        %1650 = vmatpush1.bf16.msra.mxu0 0
        %1651 = vmatprep.subr.bf16.mxu0 0
        %1652 = vmatpush1.bf16.msra.mxu0 0
        %1653 = vmatprep.subr.bf16.mxu0 0
        %1654 = vmatpush1.bf16.msra.mxu0 0
        %1655 = vmatprep.subr.bf16.mxu0 0
        %1656 = vmatpush1.bf16.msra.mxu0 0
        %1657 = vmatprep.subr.bf16.mxu0 0
        %1658 = vmatpush1.bf16.msra.mxu0 0
        %1659 = vmatprep.subr.bf16.mxu0 0
        %1660 = vmatpush1.bf16.msra.mxu0 0
        %1661 = vmatprep.mubr.bf16.mxu0 0
        %1662 = vmatmul.mubr.bf16.gmra.mrb[0].mxu0 %v1624
        %v1663 = vpop.f32.mrb[0].mxu0
        %v1664 = vadd.f32 0.0, %v1663
        %v1665 = vpop.f32.mrb[0].mxu0
        %v1666 = vpop.f32.mrb[0].mxu0
        %v1667 = vpop.f32.mrb[0].mxu0
        %1668 = vdwg.mxu0
        %v1669 = vsel %vm381, %v1526, 0.0
        %v1670 = vsel %vm381, %v1572, 0.0
        %v1671 = vadd.f32 %v1669, %v1670
        %v1672 = vsel %vm381, %v1618, 0.0
        %v1673 = vadd.f32 %v1671, %v1672
        %v1674 = vsel %vm381, %v1664, 0.0
        %v1675 = vadd.f32 %v1673, %v1674
        %1676 = vst.msk [vmem:[%s326] sm:$0xff] %vm381, %v1675
        %s1677 = sand.u32 %s196, 1
        %s1678 = scalar_lea.sflag [#allocation3], %s1677
        %s1679 = sand.u32 %s196, 1
        %s1680 = smul.addr %s1679, 8
        %s1681 = scalar_lea.vmem [#allocation2], %s1680
        %s1682 = sand.u32 %s222, 1
        %s1683 = scalar_lea.sflag [#allocation5], %s1682
        %s1684 = sand.u32 %s222, 1
        %s1685 = smul.addr %s1684, 32
        %s1686 = scalar_lea.vmem [#allocation4], %s1685
        // Predicated region
        $region49: #{tpu_custom_call.1} parent=47 // pred_check
          %p1687 = pneg %p206
        $region50: #{tpu_custom_call.1} parent=47 // pred_check_branch
          %1689 = sbr.rel (%p1687) target = $region52
        $region51: #{tpu_custom_call.1} parent=47 // pred_region
          %s1691 = ssub.s32 128, 128
          %1692 = vsyncadd %s1678, %s1691
          %s1693 = smul.addr %s26, 128
          %s1694 = scalar_lea.hbm %s7, %s1693
          %s1696 = sshll.u32 %s1681, 4
          %s1697 = int_to_ptr.vmem [resolvable:$true] %s1696
          %1699 = dma.vmem_to_hbm [thread:$0]  %s1697, 128, %s1694, %s1678
        $region52: #{tpu_custom_call.1} parent=47 // pred_fallthru
          _
        // Predicated region
        $region53: #{tpu_custom_call.1} parent=47 // pred_check
          %p1700 = pneg %p232
        $region54: #{tpu_custom_call.1} parent=47 // pred_check_branch
          %1702 = sbr.rel (%p1700) target = $region56
        $region55: #{tpu_custom_call.1} parent=47 // pred_region
          %s1704 = ssub.s32 512, 512
          %1705 = vsyncadd %s1683, %s1704
          %s1706 = smul.addr %s26, 4
          %s1707 = smul.addr %s1706, 128
          %s1708 = scalar_lea.hbm %s8, %s1707
          %s1709 = sshll.u32 %s1686, 4
          %s1710 = int_to_ptr.vmem [resolvable:$true] %s1709
          %1715 = dma.vmem_to_hbm [thread:$0]  %s1710, 512, %s1708, %s1683, 128, 128, 8
        $region56: #{tpu_custom_call.1} parent=47 // pred_fallthru
          _
      $region48: #{tpu_custom_call.1} parent=5 // pred_fallthru
        _
      %p1716 = scmp.le.s32.totalorder 2, %s21
      // Predicated region
      $region57: #{tpu_custom_call.1} parent=5 // pred_check
        %p1717 = pneg %p1716
      $region58: #{tpu_custom_call.1} parent=5 // pred_check_branch
        %1719 = sbr.rel (%p1717) target = $region60
      $region59: #{tpu_custom_call.1} parent=5 // pred_region
        %s1720 = ssub.s32 %s21, 2
        // Predicated region
        $region61: #{tpu_custom_call.1} parent=59 // pred_check
          %p1721 = pneg %p212
        $region62: #{tpu_custom_call.1} parent=59 // pred_check_branch
          %1723 = sbr.rel (%p1721) target = $region64
        $region63: #{tpu_custom_call.1} parent=59 // pred_region
          %s1724 = sand.u32 %s197, 1
          %s1725 = scalar_lea.sflag [#allocation3], %s1724
          %s1726 = sand.u32 %s197, 1
          %s1727 = smul.addr %s1726, 8
          %s1728 = scalar_lea.vmem [#allocation2], %s1727
          %1729 = dma.done %s1725, 128
        $region64: #{tpu_custom_call.1} parent=59 // pred_fallthru
          _
        // Predicated region
        $region65: #{tpu_custom_call.1} parent=59 // pred_check
          %p1730 = pneg %p238
        $region66: #{tpu_custom_call.1} parent=59 // pred_check_branch
          %1732 = sbr.rel (%p1730) target = $region68
        $region67: #{tpu_custom_call.1} parent=59 // pred_region
          %s1733 = sand.u32 %s223, 1
          %s1734 = scalar_lea.sflag [#allocation5], %s1733
          %s1735 = sand.u32 %s223, 1
          %s1736 = smul.addr %s1735, 32
          %s1737 = scalar_lea.vmem [#allocation4], %s1736
          %1738 = dma.done %s1734, 512
        $region68: #{tpu_custom_call.1} parent=59 // pred_fallthru
          _
      $region60: #{tpu_custom_call.1} parent=5 // pred_fallthru
        _
    $region6: #{tpu_custom_call.1} parent=1 // loop_footer
      %s25 = sadd.s32 1, %s21
    $region7: #{tpu_custom_call.1} parent=1 // loop_footer_branch
      %20 = sbr.rel target = $region3
    $region8: #{tpu_custom_call.1} parent=1 // loop_exit
      _
    %1739 = vsyncpa [#allocation3], 1
    %s1740 = scalar_lea.sflag [#allocation3], 1
    %1741 = vsyncpa %s1740, 1
    %1742 = vsyncpa [#allocation5], 1
    %s1743 = scalar_lea.sflag [#allocation5], 1
    %1744 = vsyncpa %s1743, 1

</llo_original>
